<compile_context>
chip_gen: v5e
topology: v5e:2x2
jax: 0.10.0
libtpu: 0.0.40
codegen_flags: <defaults>
</compile_context>

<pallas_src>
from functools import partial

import jax
import jax.numpy as jnp
from jax import lax
from jax.experimental import pallas as pl
from jax.experimental.pallas import tpu as pltpu


def bottleneck_kernel(x_hbm, w1_ref, s1_ref, b1_ref,
                      w2_ref, s2_ref, b2_ref,
                      w3_ref, s3_ref, b3_ref,
                      out_ref, x_buf, copy_sem,
                      *, dilation, tile_h, img_h):
    """One (batch, row-tile) per grid step.

    x_hbm   : (N, H+2*pad, W, Cin)     bf16, H zero-padded by pad, left in HBM
    w1_ref  : (Cin, P)        bf16     1x1 conv weight
    w2_ref  : (9*P, P)        bf16     3x3 dilated conv weight, (ky,kx,in) flat
    w3_ref  : (P, 4P)         bf16     1x1 conv weight
    s*_ref  : (1, C)          f32      frozen-BN scale
    b*_ref  : (1, C)          f32      frozen-BN shift
    out_ref : (1, TH, W, 4P)  f32
    x_buf   : (2, TH+2*pad, W, Cin) bf16 VMEM scratch (double-buffered slab)
    copy_sem: (2,) DMA semaphores
    """
    pad = dilation
    TH = tile_h
    THp = TH + 2 * pad
    W = out_ref.shape[2]
    Cin = x_buf.shape[3]
    P = w1_ref.shape[1]
    Cout = w3_ref.shape[1]

    n = pl.program_id(0)
    t = pl.program_id(1)
    num_t = pl.num_programs(1)
    slot = t & 1

    def slab_copy(tile_idx, sl):
        row0 = pl.multiple_of(tile_idx * TH, TH)
        return pltpu.make_async_copy(
            x_hbm.at[n, pl.ds(row0, THp)], x_buf.at[sl], copy_sem.at[sl])

    # ---- double-buffered halo DMA -------------------------------------------
    # Prime the pipeline at the first row-tile of each image.
    @pl.when(t == 0)
    def _():
        slab_copy(t, 0).start()          # t == 0 here

    # Wait for this tile's slab, then immediately prefetch the next tile's.
    slab_copy(t, slot).wait()

    @pl.when(t + 1 < num_t)
    def _():
        slab_copy(t + 1, 1 - slot).start()

    x_halo = x_buf[slot]                                      # (THp, W, Cin) bf16

    # ---- conv1 (1x1) + bn1 + relu on the halo'd slab -------------------------
    h1 = jnp.dot(x_halo.reshape(THp * W, Cin), w1_ref[...],
                 preferred_element_type=jnp.float32)          # (THp*W, P) f32
    h1 = jnp.maximum(h1 * s1_ref[...] + b1_ref[...], 0.0)
    h1 = h1.reshape(THp, W, P)

    # Halo rows outside the image must be zero for conv2's zero padding
    # (conv1(0)+BN+ReLU is NOT zero, so mask after the activation).
    ridx = lax.broadcasted_iota(jnp.int32, (THp, 1, 1), 0)
    r_img = t * TH - pad + ridx                               # image-row index
    valid = jnp.logical_and(r_img >= 0, r_img < img_h)
    h1 = jnp.where(valid, h1, 0.0).astype(jnp.bfloat16)       # (THp, W, P) bf16

    # ---- conv2 (3x3, dilation) as one fused (TH*W, 9P) @ (9P, P) matmul ------
    zw = jnp.zeros((THp, pad, P), jnp.bfloat16)
    h1w = jnp.concatenate([zw, h1, zw], axis=1)               # (THp, W+2p, P)
    # 3 W-shifted slabs (expensive axis) built once ...
    shifted = [h1w[:, kx * dilation:kx * dilation + W, :] for kx in range(3)]
    # ... then only cheap leading-axis (H) slices for the 9 taps.
    taps = [shifted[kx][ky * dilation:ky * dilation + TH]
            for ky in range(3) for kx in range(3)]            # order matches w2 reshape
    cat = jnp.concatenate(taps, axis=-1)                      # (TH, W, 9P) bf16
    h2 = jnp.dot(cat.reshape(TH * W, 9 * P), w2_ref[...],
                 preferred_element_type=jnp.float32)          # (TH*W, P) f32
    h2 = jnp.maximum(h2 * s2_ref[...] + b2_ref[...], 0.0)

    # ---- conv3 (1x1 -> 4P) + bn3 + residual + relu ---------------------------
    h3 = jnp.dot(h2.astype(jnp.bfloat16), w3_ref[...],
                 preferred_element_type=jnp.float32)          # (TH*W, Cout) f32
    h3 = h3 * s3_ref[...] + b3_ref[...]
    res = x_halo[pad:pad + TH].astype(jnp.float32)            # (TH, W, Cin==Cout)
    out = jnp.maximum(h3.reshape(TH, W, Cout) + res, 0.0)
    out_ref[0] = out.astype(out_ref.dtype)


def _bn_scale_shift(gamma, beta, mean, var, eps=1e-5):
    scale = gamma / jnp.sqrt(var + eps)
    shift = beta - mean * scale
    return scale[None, :].astype(jnp.float32), shift[None, :].astype(jnp.float32)


def bottleneck_forward(x_nchw, params, dilation=2, tile_h=8):
    """Pallas implementation of Bottleneck.forward (stride=1, downsample=None)."""
    N, C, H, W = x_nchw.shape
    P = params["w1"].shape[1]
    Cout = params["w3"].shape[1]
    assert Cout == C, "downsample=None requires inplanes == 4*planes"
    pad = dilation
    TH = min(tile_h, H)
    assert H % TH == 0, "H must be divisible by the row-tile size"
    THp = TH + 2 * pad

    # NHWC, zero-pad H by `pad` on both sides (keeps the halo DMA in-bounds),
    # cast activations + conv weights to bf16 for the MXU.
    x = jnp.transpose(x_nchw, (0, 2, 3, 1))
    x = jnp.pad(x, ((0, 0), (pad, pad), (0, 0), (0, 0))).astype(jnp.bfloat16)

    w1 = params["w1"].astype(jnp.bfloat16)                       # (C, P)
    w2f = params["w2"].reshape(9 * P, P).astype(jnp.bfloat16)    # (ky,kx,in) flat
    w3 = params["w3"].astype(jnp.bfloat16)                       # (P, Cout)
    s1, b1 = _bn_scale_shift(*params["bn1"])
    s2, b2 = _bn_scale_shift(*params["bn2"])
    s3, b3 = _bn_scale_shift(*params["bn3"])

    # Explicit VMEM budget sized to this kernel's footprint (clamped for v7x).
    out_blk_bytes = TH * W * Cout * 4
    xbuf_bytes = 2 * THp * W * C * 2                             # double buffer
    weight_bytes = (w1.size + w2f.size + w3.size) * 2 + \
                   (s1.size + b1.size + s2.size + b2.size + s3.size + b3.size) * 4
    interm_bytes = THp * (W + 2 * pad) * (12 * P + 2 * Cout) * 4
    est = 2 * out_blk_bytes + xbuf_bytes + 2 * weight_bytes + 2 * interm_bytes
    vmem_limit = int(min(max(2 * est, 32 * 1024 * 1024), 48 * 1024 * 1024))

    flops = 2 * N * H * W * (C * P + 9 * P * P + P * Cout)
    bytes_accessed = int(x.size * 2 + N * H * W * Cout * 4 +
                         (w1.size + w2f.size + w3.size) * 2 +
                         (s1.size + b1.size + s2.size + b2.size +
                          s3.size + b3.size) * 4)

    out = pl.pallas_call(
        partial(bottleneck_kernel, dilation=dilation, tile_h=TH, img_h=H),
        out_shape=jax.ShapeDtypeStruct((N, H, W, Cout), jnp.float32),
        grid_spec=pltpu.PrefetchScalarGridSpec(
            num_scalar_prefetch=0,
            grid=(N, H // TH),
            in_specs=[
                pl.BlockSpec(memory_space=pl.ANY),                 # x stays in HBM
                pl.BlockSpec((C, P), lambda n, t: (0, 0)),
                pl.BlockSpec((1, P), lambda n, t: (0, 0)),
                pl.BlockSpec((1, P), lambda n, t: (0, 0)),
                pl.BlockSpec((9 * P, P), lambda n, t: (0, 0)),
                pl.BlockSpec((1, P), lambda n, t: (0, 0)),
                pl.BlockSpec((1, P), lambda n, t: (0, 0)),
                pl.BlockSpec((P, Cout), lambda n, t: (0, 0)),
                pl.BlockSpec((1, Cout), lambda n, t: (0, 0)),
                pl.BlockSpec((1, Cout), lambda n, t: (0, 0)),
            ],
            out_specs=pl.BlockSpec((1, TH, W, Cout), lambda n, t: (n, t, 0, 0)),
            scratch_shapes=[
                pltpu.VMEM((2, THp, W, C), jnp.bfloat16),          # 2-slot halo slabs
                pltpu.SemaphoreType.DMA((2,)),
            ],
        ),
        compiler_params=pltpu.CompilerParams(
            # Row-tile axis must run in order on a core so the slab prefetch
            # target (t+1 within the same image) is deterministic.
            dimension_semantics=("parallel", "arbitrary"),
            vmem_limit_bytes=vmem_limit),
        cost_estimate=pl.CostEstimate(flops=flops, transcendentals=0,
                                      bytes_accessed=bytes_accessed),
    )(x, w1, s1, b1, w2f, s2, b2, w3, s3, b3)

    return jnp.transpose(out, (0, 3, 1, 2))                       # back to NCHW


def ref_forward(x_nchw, params, dilation=2):
    """Pure-JAX reference (lax convs).  Inputs/weights rounded to bf16 to match
    the kernel's MXU input precision; all arithmetic in f32."""
    def r(a):
        return a.astype(jnp.bfloat16).astype(jnp.float32)

    x = r(jnp.transpose(x_nchw, (0, 2, 3, 1)))
    dn = ("NHWC", "HWIO", "NHWC")

    def bn(h, gamma, beta, mean, var, eps=1e-5):
        return (h - mean) / jnp.sqrt(var + eps) * gamma + beta

    h = lax.conv_general_dilated(x, r(params["w1"])[None, None], (1, 1), "VALID",
                                 dimension_numbers=dn)
    h = jax.nn.relu(bn(h, *params["bn1"]))
    h = lax.conv_general_dilated(h, r(params["w2"]), (1, 1),
                                 [(dilation, dilation), (dilation, dilation)],
                                 rhs_dilation=(dilation, dilation),
                                 dimension_numbers=dn)
    h = jax.nn.relu(bn(h, *params["bn2"]))
    h = lax.conv_general_dilated(h, r(params["w3"])[None, None], (1, 1), "VALID",
                                 dimension_numbers=dn)
    h = bn(h, *params["bn3"])
    out = jax.nn.relu(h + x)
    return jnp.transpose(out, (0, 3, 1, 2))


def make_params(key, inplanes, planes):
    ks = jax.random.split(key, 6)
    expansion = 4

    def bn_params(k, c):
        k0, k1, k2, k3 = jax.random.split(k, 4)
        gamma = jax.random.uniform(k0, (c,), jnp.float32, 0.5, 1.5)
        beta = 0.1 * jax.random.normal(k1, (c,), jnp.float32)
        mean = 0.1 * jax.random.normal(k2, (c,), jnp.float32)
        var = jax.random.uniform(k3, (c,), jnp.float32, 0.5, 1.5)
        return (gamma, beta, mean, var)

    # conv weights stored as (Cin, Cout) / HWIO (kernel-friendly layout);
    # equivalent to PyTorch's (Cout, Cin, kH, kW) after transpose.
    return {
        "w1": 0.1 * jax.random.normal(ks[0], (inplanes, planes), jnp.float32),
        "w2": 0.1 * jax.random.normal(ks[1], (3, 3, planes, planes), jnp.float32),
        "w3": 0.1 * jax.random.normal(ks[2], (planes, planes * expansion), jnp.float32),
        "bn1": bn_params(ks[3], planes),
        "bn2": bn_params(ks[4], planes),
        "bn3": bn_params(ks[5], planes * expansion),
    }


if __name__ == "__main__":
    key = jax.random.PRNGKey(0)
    k_x, k_p = jax.random.split(key)

    # Small but lane-friendly shapes: planes=32 -> Cout=128 (lane-dense),
    # inplanes=128, 16x16 spatial, batch=2, dilation=2 (padding=2 path).
    N, inplanes, planes, H, W = 2, 128, 32, 16, 16
    dilation = 2

    x = jax.random.normal(k_x, (N, inplanes, H, W), jnp.float32)   # NCHW like PyTorch
    params = make_params(k_p, inplanes, planes)

    out = jax.block_until_ready(bottleneck_forward(x, params, dilation=dilation))
    ref = jax.block_until_ready(ref_forward(x, params, dilation=dilation))

    assert out.shape == (N, planes * 4, H, W)
    err = float(jnp.max(jnp.abs(out - ref)))
    assert jnp.allclose(out, ref, atol=1e-1, rtol=1e-1), f"max abs err {err}"

    print("KERNEL_OK")
</pallas_src>

<mosaic_0001>
module attributes {stable_mosaic.version = 11 : i64} {
  func.func @bottleneck_kernel(%arg0: i32, %arg1: i32, %arg2: memref<2x20x16x128xbf16, #tpu.memory_space<any>>, %arg3: memref<128x32xbf16, #tpu.memory_space<vmem>>, %arg4: memref<1x32xf32, #tpu.memory_space<vmem>>, %arg5: memref<1x32xf32, #tpu.memory_space<vmem>>, %arg6: memref<288x32xbf16, #tpu.memory_space<vmem>>, %arg7: memref<1x32xf32, #tpu.memory_space<vmem>>, %arg8: memref<1x32xf32, #tpu.memory_space<vmem>>, %arg9: memref<32x128xbf16, #tpu.memory_space<vmem>>, %arg10: memref<1x128xf32, #tpu.memory_space<vmem>>, %arg11: memref<1x128xf32, #tpu.memory_space<vmem>>, %arg12: memref<1x8x16x128xf32, #tpu.memory_space<vmem>>, %arg13: memref<2x12x16x128xbf16, #tpu.memory_space<vmem>>, %arg14: memref<2x!tpu.dma_semaphore, #tpu.memory_space<semaphore_mem>>) attributes {dimension_semantics = [#tpu.dimension_semantics<parallel>, #tpu.dimension_semantics<arbitrary>], iteration_bounds = array<i64: 2, 2>, scalar_prefetch = 0 : i64, scratch_operands = 2 : i64, tpu.core_type = #tpu.core_type<tc>, window_params = [{}, {pipeline_mode = #tpu.pipeline_mode<synchronous>, transform_indices = @transform_1, window_bounds = array<i64: 128, 32>}, {pipeline_mode = #tpu.pipeline_mode<synchronous>, transform_indices = @transform_2, window_bounds = array<i64: 1, 32>}, {pipeline_mode = #tpu.pipeline_mode<synchronous>, transform_indices = @transform_3, window_bounds = array<i64: 1, 32>}, {pipeline_mode = #tpu.pipeline_mode<synchronous>, transform_indices = @transform_4, window_bounds = array<i64: 288, 32>}, {pipeline_mode = #tpu.pipeline_mode<synchronous>, transform_indices = @transform_5, window_bounds = array<i64: 1, 32>}, {pipeline_mode = #tpu.pipeline_mode<synchronous>, transform_indices = @transform_6, window_bounds = array<i64: 1, 32>}, {pipeline_mode = #tpu.pipeline_mode<synchronous>, transform_indices = @transform_7, window_bounds = array<i64: 32, 128>}, {pipeline_mode = #tpu.pipeline_mode<synchronous>, transform_indices = @transform_8, window_bounds = array<i64: 1, 128>}, {pipeline_mode = #tpu.pipeline_mode<synchronous>, transform_indices = @transform_9, window_bounds = array<i64: 1, 128>}, {transform_indices = @transform_10, window_bounds = array<i64: 1, 8, 16, 128>}]} {
    %c1_i32 = arith.constant 1 : i32
    %0 = arith.andi %arg1, %c1_i32 : i32
    %c0_i32 = arith.constant 0 : i32
    %1 = arith.cmpi eq, %arg1, %c0_i32 : i32
    %2 = arith.extui %1 : i1 to i32
    %c0_i32_0 = arith.constant 0 : i32
    %3 = arith.cmpi ne, %2, %c0_i32_0 : i32
    scf.if %3 {
      %c8_i32_42 = arith.constant 8 : i32
      %90 = arith.muli %arg1, %c8_i32_42 : i32
      %91 = tpu.assume_multiple %90, 8 : i32
      %c0_i32_43 = arith.constant 0 : i32
      %c0_i32_44 = arith.constant 0 : i32
      %c0_i32_45 = arith.constant 0 : i32
      %c0_i32_46 = arith.constant 0 : i32
      %92 = tpu.memref_slice %arg2[%arg0, %91, %c0_i32_45, %c0_i32_46] : memref<2x20x16x128xbf16, #tpu.memory_space<any>> -> memref<1x12x16x128xbf16, #tpu.memory_space<any>>
      %93 = tpu.memref_squeeze %92 : memref<1x12x16x128xbf16, #tpu.memory_space<any>> -> memref<12x16x128xbf16, #tpu.memory_space<any>>
      %c0_i32_47 = arith.constant 0 : i32
      %c0_i32_48 = arith.constant 0 : i32
      %c0_i32_49 = arith.constant 0 : i32
      %94 = tpu.memref_slice %arg13[%c0_i32_43, %c0_i32_47, %c0_i32_48, %c0_i32_49] : memref<2x12x16x128xbf16, #tpu.memory_space<vmem>> -> memref<1x12x16x128xbf16, #tpu.memory_space<vmem>>
      %95 = tpu.memref_squeeze %94 : memref<1x12x16x128xbf16, #tpu.memory_space<vmem>> -> memref<12x16x128xbf16, #tpu.memory_space<vmem>>
      %96 = tpu.memref_slice %arg14[%c0_i32_44] : memref<2x!tpu.dma_semaphore, #tpu.memory_space<semaphore_mem>> -> memref<1x!tpu.dma_semaphore, #tpu.memory_space<semaphore_mem>>
      %97 = tpu.memref_squeeze %96 : memref<1x!tpu.dma_semaphore, #tpu.memory_space<semaphore_mem>> -> memref<!tpu.dma_semaphore, #tpu.memory_space<semaphore_mem>>
      tpu.enqueue_dma source(%93 : memref<12x16x128xbf16, #tpu.memory_space<any>>) target(%95 : memref<12x16x128xbf16, #tpu.memory_space<vmem>>) target_semaphore(%97 : memref<!tpu.dma_semaphore, #tpu.memory_space<semaphore_mem>>)
    } else {
    }
    %c8_i32 = arith.constant 8 : i32
    %4 = arith.muli %arg1, %c8_i32 : i32
    %5 = tpu.assume_multiple %4, 8 : i32
    %c0_i32_1 = arith.constant 0 : i32
    %c0_i32_2 = arith.constant 0 : i32
    %6 = tpu.memref_slice %arg2[%arg0, %5, %c0_i32_1, %c0_i32_2] : memref<2x20x16x128xbf16, #tpu.memory_space<any>> -> memref<1x12x16x128xbf16, #tpu.memory_space<any>>
    %7 = tpu.memref_squeeze %6 : memref<1x12x16x128xbf16, #tpu.memory_space<any>> -> memref<12x16x128xbf16, #tpu.memory_space<any>>
    %c0_i32_3 = arith.constant 0 : i32
    %c0_i32_4 = arith.constant 0 : i32
    %c0_i32_5 = arith.constant 0 : i32
    %8 = tpu.memref_slice %arg13[%0, %c0_i32_3, %c0_i32_4, %c0_i32_5] : memref<2x12x16x128xbf16, #tpu.memory_space<vmem>> -> memref<1x12x16x128xbf16, #tpu.memory_space<vmem>>
    %9 = tpu.memref_squeeze %8 : memref<1x12x16x128xbf16, #tpu.memory_space<vmem>> -> memref<12x16x128xbf16, #tpu.memory_space<vmem>>
    %10 = tpu.memref_slice %arg14[%0] : memref<2x!tpu.dma_semaphore, #tpu.memory_space<semaphore_mem>> -> memref<1x!tpu.dma_semaphore, #tpu.memory_space<semaphore_mem>>
    %11 = tpu.memref_squeeze %10 : memref<1x!tpu.dma_semaphore, #tpu.memory_space<semaphore_mem>> -> memref<!tpu.dma_semaphore, #tpu.memory_space<semaphore_mem>>
    tpu.wait_dma2 semaphore(%11 : memref<!tpu.dma_semaphore, #tpu.memory_space<semaphore_mem>>) src(%7 : memref<12x16x128xbf16, #tpu.memory_space<any>>) dst(%9 : memref<12x16x128xbf16, #tpu.memory_space<vmem>>)
    %c1_i32_6 = arith.constant 1 : i32
    %12 = arith.addi %arg1, %c1_i32_6 : i32
    %c2_i32 = arith.constant 2 : i32
    %13 = arith.cmpi slt, %12, %c2_i32 : i32
    %14 = arith.extui %13 : i1 to i32
    %c0_i32_7 = arith.constant 0 : i32
    %15 = arith.cmpi ne, %14, %c0_i32_7 : i32
    scf.if %15 {
      %c1_i32_42 = arith.constant 1 : i32
      %90 = arith.addi %arg1, %c1_i32_42 : i32
      %c1_i32_43 = arith.constant 1 : i32
      %91 = arith.subi %c1_i32_43, %0 : i32
      %c8_i32_44 = arith.constant 8 : i32
      %92 = arith.muli %90, %c8_i32_44 : i32
      %93 = tpu.assume_multiple %92, 8 : i32
      %c0_i32_45 = arith.constant 0 : i32
      %c0_i32_46 = arith.constant 0 : i32
      %94 = tpu.memref_slice %arg2[%arg0, %93, %c0_i32_45, %c0_i32_46] : memref<2x20x16x128xbf16, #tpu.memory_space<any>> -> memref<1x12x16x128xbf16, #tpu.memory_space<any>>
      %95 = tpu.memref_squeeze %94 : memref<1x12x16x128xbf16, #tpu.memory_space<any>> -> memref<12x16x128xbf16, #tpu.memory_space<any>>
      %c0_i32_47 = arith.constant 0 : i32
      %c0_i32_48 = arith.constant 0 : i32
      %c0_i32_49 = arith.constant 0 : i32
      %96 = tpu.memref_slice %arg13[%91, %c0_i32_47, %c0_i32_48, %c0_i32_49] : memref<2x12x16x128xbf16, #tpu.memory_space<vmem>> -> memref<1x12x16x128xbf16, #tpu.memory_space<vmem>>
      %97 = tpu.memref_squeeze %96 : memref<1x12x16x128xbf16, #tpu.memory_space<vmem>> -> memref<12x16x128xbf16, #tpu.memory_space<vmem>>
      %98 = tpu.memref_slice %arg14[%91] : memref<2x!tpu.dma_semaphore, #tpu.memory_space<semaphore_mem>> -> memref<1x!tpu.dma_semaphore, #tpu.memory_space<semaphore_mem>>
      %99 = tpu.memref_squeeze %98 : memref<1x!tpu.dma_semaphore, #tpu.memory_space<semaphore_mem>> -> memref<!tpu.dma_semaphore, #tpu.memory_space<semaphore_mem>>
      tpu.enqueue_dma source(%95 : memref<12x16x128xbf16, #tpu.memory_space<any>>) target(%97 : memref<12x16x128xbf16, #tpu.memory_space<vmem>>) target_semaphore(%99 : memref<!tpu.dma_semaphore, #tpu.memory_space<semaphore_mem>>)
    } else {
    }
    %16 = arith.index_cast %0 : i32 to index
    %c0 = arith.constant 0 : index
    %c0_8 = arith.constant 0 : index
    %c0_9 = arith.constant 0 : index
    %17 = vector.load %arg13[%16, %c0, %c0_8, %c0_9] : memref<2x12x16x128xbf16, #tpu.memory_space<vmem>>, vector<1x12x16x128xbf16>
    %18 = vector.shape_cast %17 : vector<1x12x16x128xbf16> to vector<12x16x128xbf16>
    %19 = vector.shape_cast %18 : vector<12x16x128xbf16> to vector<192x128xbf16>
    %c0_10 = arith.constant 0 : index
    %c0_11 = arith.constant 0 : index
    %20 = vector.load %arg3[%c0_10, %c0_11] : memref<128x32xbf16, #tpu.memory_space<vmem>>, vector<128x32xbf16>
    %cst = arith.constant dense<0.000000e+00> : vector<192x32xf32>
    %21 = tpu.matmul %19, %20, %cst {dimension_numbers = #tpu.dot_dimension_numbers<[1], [0], [0], [1], [0, 0, 1, 1], [], []>} : vector<192x128xbf16>, vector<128x32xbf16>, vector<192x32xf32> -> vector<192x32xf32>
    %c0_12 = arith.constant 0 : index
    %c0_13 = arith.constant 0 : index
    %22 = vector.load %arg4[%c0_12, %c0_13] : memref<1x32xf32, #tpu.memory_space<vmem>>, vector<1x32xf32>
    %23 = vector.broadcast %22 : vector<1x32xf32> to vector<192x32xf32>
    %24 = arith.mulf %21, %23 : vector<192x32xf32>
    %c0_14 = arith.constant 0 : index
    %c0_15 = arith.constant 0 : index
    %25 = vector.load %arg5[%c0_14, %c0_15] : memref<1x32xf32, #tpu.memory_space<vmem>>, vector<1x32xf32>
    %26 = vector.broadcast %25 : vector<1x32xf32> to vector<192x32xf32>
    %27 = arith.addf %24, %26 : vector<192x32xf32>
    %cst_16 = arith.constant 0.000000e+00 : f32
    %28 = vector.broadcast %cst_16 : f32 to vector<192x32xf32>
    %29 = arith.maximumf %27, %28 : vector<192x32xf32>
    %30 = vector.shape_cast %29 : vector<192x32xf32> to vector<12x16x32xf32>
    %31 = tpu.iota {dimensions = array<i32: 0>} : vector<12x1x1xi32>
    %c8_i32_17 = arith.constant 8 : i32
    %32 = arith.muli %arg1, %c8_i32_17 : i32
    %c2_i32_18 = arith.constant 2 : i32
    %33 = arith.subi %32, %c2_i32_18 : i32
    %34 = vector.broadcast %33 : i32 to vector<12x1x1xi32>
    %35 = arith.addi %34, %31 : vector<12x1x1xi32>
    %c0_i32_19 = arith.constant 0 : i32
    %36 = vector.broadcast %c0_i32_19 : i32 to vector<12x1x1xi32>
    %37 = arith.cmpi sge, %35, %36 : vector<12x1x1xi32>
    %c16_i32 = arith.constant 16 : i32
    %38 = vector.broadcast %c16_i32 : i32 to vector<12x1x1xi32>
    %39 = arith.cmpi slt, %35, %38 : vector<12x1x1xi32>
    %40 = arith.andi %37, %39 : vector<12x1x1xi1>
    %cst_20 = arith.constant 0.000000e+00 : f32
    %41 = vector.shape_cast %40 : vector<12x1x1xi1> to vector<12x1x1xi1>
    %42 = vector.broadcast %41 : vector<12x1x1xi1> to vector<12x16x32xi1>
    %43 = vector.broadcast %cst_20 : f32 to vector<12x16x32xf32>
    %44 = arith.select %42, %30, %43 : vector<12x16x32xi1>, vector<12x16x32xf32>
    %45 = arith.truncf %44 : vector<12x16x32xf32> to vector<12x16x32xbf16>
    %cst_21 = arith.constant 0.000000e+00 : bf16
    %46 = vector.broadcast %cst_21 : bf16 to vector<12x2x32xbf16>
    %47 = tpu.concatenate %46, %45, %46 in 1 : vector<12x2x32xbf16>, vector<12x16x32xbf16>, vector<12x2x32xbf16> -> vector<12x20x32xbf16>
    %48 = vector.extract_strided_slice %47 {offsets = [0, 0, 0], sizes = [12, 16, 32], strides = [1, 1, 1]} : vector<12x20x32xbf16> to vector<12x16x32xbf16>
    %49 = vector.extract_strided_slice %47 {offsets = [0, 2, 0], sizes = [12, 16, 32], strides = [1, 1, 1]} : vector<12x20x32xbf16> to vector<12x16x32xbf16>
    %50 = vector.extract_strided_slice %47 {offsets = [0, 4, 0], sizes = [12, 16, 32], strides = [1, 1, 1]} : vector<12x20x32xbf16> to vector<12x16x32xbf16>
    %51 = vector.extract_strided_slice %48 {offsets = [0, 0, 0], sizes = [8, 16, 32], strides = [1, 1, 1]} : vector<12x16x32xbf16> to vector<8x16x32xbf16>
    %52 = vector.extract_strided_slice %49 {offsets = [0, 0, 0], sizes = [8, 16, 32], strides = [1, 1, 1]} : vector<12x16x32xbf16> to vector<8x16x32xbf16>
    %53 = vector.extract_strided_slice %50 {offsets = [0, 0, 0], sizes = [8, 16, 32], strides = [1, 1, 1]} : vector<12x16x32xbf16> to vector<8x16x32xbf16>
    %54 = vector.extract_strided_slice %48 {offsets = [2, 0, 0], sizes = [8, 16, 32], strides = [1, 1, 1]} : vector<12x16x32xbf16> to vector<8x16x32xbf16>
    %55 = vector.extract_strided_slice %49 {offsets = [2, 0, 0], sizes = [8, 16, 32], strides = [1, 1, 1]} : vector<12x16x32xbf16> to vector<8x16x32xbf16>
    %56 = vector.extract_strided_slice %50 {offsets = [2, 0, 0], sizes = [8, 16, 32], strides = [1, 1, 1]} : vector<12x16x32xbf16> to vector<8x16x32xbf16>
    %57 = vector.extract_strided_slice %48 {offsets = [4, 0, 0], sizes = [8, 16, 32], strides = [1, 1, 1]} : vector<12x16x32xbf16> to vector<8x16x32xbf16>
    %58 = vector.extract_strided_slice %49 {offsets = [4, 0, 0], sizes = [8, 16, 32], strides = [1, 1, 1]} : vector<12x16x32xbf16> to vector<8x16x32xbf16>
    %59 = vector.extract_strided_slice %50 {offsets = [4, 0, 0], sizes = [8, 16, 32], strides = [1, 1, 1]} : vector<12x16x32xbf16> to vector<8x16x32xbf16>
    %60 = tpu.concatenate %51, %52, %53, %54, %55, %56, %57, %58, %59 in 2 : vector<8x16x32xbf16>, vector<8x16x32xbf16>, vector<8x16x32xbf16>, vector<8x16x32xbf16>, vector<8x16x32xbf16>, vector<8x16x32xbf16>, vector<8x16x32xbf16>, vector<8x16x32xbf16>, vector<8x16x32xbf16> -> vector<8x16x288xbf16>
    %61 = vector.shape_cast %60 : vector<8x16x288xbf16> to vector<128x288xbf16>
    %c0_22 = arith.constant 0 : index
    %c0_23 = arith.constant 0 : index
    %62 = vector.load %arg6[%c0_22, %c0_23] : memref<288x32xbf16, #tpu.memory_space<vmem>>, vector<288x32xbf16>
    %cst_24 = arith.constant dense<0.000000e+00> : vector<128x32xf32>
    %63 = tpu.matmul %61, %62, %cst_24 {dimension_numbers = #tpu.dot_dimension_numbers<[1], [0], [0], [1], [0, 0, 1, 1], [], []>} : vector<128x288xbf16>, vector<288x32xbf16>, vector<128x32xf32> -> vector<128x32xf32>
    %c0_25 = arith.constant 0 : index
    %c0_26 = arith.constant 0 : index
    %64 = vector.load %arg7[%c0_25, %c0_26] : memref<1x32xf32, #tpu.memory_space<vmem>>, vector<1x32xf32>
    %65 = vector.broadcast %64 : vector<1x32xf32> to vector<128x32xf32>
    %66 = arith.mulf %63, %65 : vector<128x32xf32>
    %c0_27 = arith.constant 0 : index
    %c0_28 = arith.constant 0 : index
    %67 = vector.load %arg8[%c0_27, %c0_28] : memref<1x32xf32, #tpu.memory_space<vmem>>, vector<1x32xf32>
    %68 = vector.broadcast %67 : vector<1x32xf32> to vector<128x32xf32>
    %69 = arith.addf %66, %68 : vector<128x32xf32>
    %cst_29 = arith.constant 0.000000e+00 : f32
    %70 = vector.broadcast %cst_29 : f32 to vector<128x32xf32>
    %71 = arith.maximumf %69, %70 : vector<128x32xf32>
    %72 = arith.truncf %71 : vector<128x32xf32> to vector<128x32xbf16>
    %c0_30 = arith.constant 0 : index
    %c0_31 = arith.constant 0 : index
    %73 = vector.load %arg9[%c0_30, %c0_31] : memref<32x128xbf16, #tpu.memory_space<vmem>>, vector<32x128xbf16>
    %cst_32 = arith.constant dense<0.000000e+00> : vector<128x128xf32>
    %74 = tpu.matmul %72, %73, %cst_32 {dimension_numbers = #tpu.dot_dimension_numbers<[1], [0], [0], [1], [0, 0, 1, 1], [], []>} : vector<128x32xbf16>, vector<32x128xbf16>, vector<128x128xf32> -> vector<128x128xf32>
    %c0_33 = arith.constant 0 : index
    %c0_34 = arith.constant 0 : index
    %75 = vector.load %arg10[%c0_33, %c0_34] : memref<1x128xf32, #tpu.memory_space<vmem>>, vector<1x128xf32>
    %76 = vector.broadcast %75 : vector<1x128xf32> to vector<128x128xf32>
    %77 = arith.mulf %74, %76 : vector<128x128xf32>
    %c0_35 = arith.constant 0 : index
    %c0_36 = arith.constant 0 : index
    %78 = vector.load %arg11[%c0_35, %c0_36] : memref<1x128xf32, #tpu.memory_space<vmem>>, vector<1x128xf32>
    %79 = vector.broadcast %78 : vector<1x128xf32> to vector<128x128xf32>
    %80 = arith.addf %77, %79 : vector<128x128xf32>
    %81 = vector.extract_strided_slice %18 {offsets = [2, 0, 0], sizes = [8, 16, 128], strides = [1, 1, 1]} : vector<12x16x128xbf16> to vector<8x16x128xbf16>
    %82 = arith.extf %81 : vector<8x16x128xbf16> to vector<8x16x128xf32>
    %83 = vector.shape_cast %80 : vector<128x128xf32> to vector<8x16x128xf32>
    %84 = arith.addf %83, %82 : vector<8x16x128xf32>
    %cst_37 = arith.constant 0.000000e+00 : f32
    %85 = vector.broadcast %cst_37 : f32 to vector<8x16x128xf32>
    %86 = arith.maximumf %84, %85 : vector<8x16x128xf32>
    %c0_38 = arith.constant 0 : index
    %c0_39 = arith.constant 0 : index
    %c0_40 = arith.constant 0 : index
    %c0_41 = arith.constant 0 : index
    %87 = vector.load %arg12[%c0_38, %c0_39, %c0_40, %c0_41] : memref<1x8x16x128xf32, #tpu.memory_space<vmem>>, vector<1x8x16x128xf32>
    %88 = vector.shape_cast %87 : vector<1x8x16x128xf32> to vector<8x16x128xf32>
    %89 = vector.shape_cast %86 : vector<8x16x128xf32> to vector<1x8x16x128xf32>
    tpu.vector_store %arg12[%c0_38, %c0_39, %c0_40, %c0_41], %89 {strides = array<i32>} : memref<1x8x16x128xf32, #tpu.memory_space<vmem>>, vector<1x8x16x128xf32>,
    return
  }
  func.func @transform_1(%arg0: i32, %arg1: i32) -> (i32, i32) {
    %c0_i32 = arith.constant 0 : i32
    %c0_i32_0 = arith.constant 0 : i32
    %c0_i32_1 = arith.constant 0 : i32
    return %c0_i32, %c0_i32_0 : i32, i32
  }
  func.func @transform_2(%arg0: i32, %arg1: i32) -> (i32, i32) {
    %c0_i32 = arith.constant 0 : i32
    %c0_i32_0 = arith.constant 0 : i32
    %c0_i32_1 = arith.constant 0 : i32
    return %c0_i32, %c0_i32_0 : i32, i32
  }
  func.func @transform_3(%arg0: i32, %arg1: i32) -> (i32, i32) {
    %c0_i32 = arith.constant 0 : i32
    %c0_i32_0 = arith.constant 0 : i32
    %c0_i32_1 = arith.constant 0 : i32
    return %c0_i32, %c0_i32_0 : i32, i32
  }
  func.func @transform_4(%arg0: i32, %arg1: i32) -> (i32, i32) {
    %c0_i32 = arith.constant 0 : i32
    %c0_i32_0 = arith.constant 0 : i32
    %c0_i32_1 = arith.constant 0 : i32
    return %c0_i32, %c0_i32_0 : i32, i32
  }
  func.func @transform_5(%arg0: i32, %arg1: i32) -> (i32, i32) {
    %c0_i32 = arith.constant 0 : i32
    %c0_i32_0 = arith.constant 0 : i32
    %c0_i32_1 = arith.constant 0 : i32
    return %c0_i32, %c0_i32_0 : i32, i32
  }
  func.func @transform_6(%arg0: i32, %arg1: i32) -> (i32, i32) {
    %c0_i32 = arith.constant 0 : i32
    %c0_i32_0 = arith.constant 0 : i32
    %c0_i32_1 = arith.constant 0 : i32
    return %c0_i32, %c0_i32_0 : i32, i32
  }
  func.func @transform_7(%arg0: i32, %arg1: i32) -> (i32, i32) {
    %c0_i32 = arith.constant 0 : i32
    %c0_i32_0 = arith.constant 0 : i32
    %c0_i32_1 = arith.constant 0 : i32
    return %c0_i32, %c0_i32_0 : i32, i32
  }
  func.func @transform_8(%arg0: i32, %arg1: i32) -> (i32, i32) {
    %c0_i32 = arith.constant 0 : i32
    %c0_i32_0 = arith.constant 0 : i32
    %c0_i32_1 = arith.constant 0 : i32
    return %c0_i32, %c0_i32_0 : i32, i32
  }
  func.func @transform_9(%arg0: i32, %arg1: i32) -> (i32, i32) {
    %c0_i32 = arith.constant 0 : i32
    %c0_i32_0 = arith.constant 0 : i32
    %c0_i32_1 = arith.constant 0 : i32
    return %c0_i32, %c0_i32_0 : i32, i32
  }
  func.func @transform_10(%arg0: i32, %arg1: i32) -> (i32, i32, i32, i32) {
    %c0_i32 = arith.constant 0 : i32
    %c0_i32_0 = arith.constant 0 : i32
    %c0_i32_1 = arith.constant 0 : i32
    return %arg0, %arg1, %c0_i32, %c0_i32_0 : i32, i32, i32, i32
  }
}

</mosaic_0001>

<llo_original>
// kernel: tpu_custom_call.1
$region0: #{tpu_custom_call.1}
  #allocation0 [shape = 'u32[]', space=smem, size = 0x4, offset = 0x4, fixed_abs, tag = 'smem constant byte address 0x4 - core index']
  #allocation1 [shape = 'u32[72,128]{1,0:T(1,128)}', space=vmem, size = 0x9000, scoped, tag = 'internal scratch']
  #allocation2 [shape = 'bf16[2,12,16,128]{3,2,1,0:T(8,128)(2,1)}', space=vmem, size = 0x18000, scoped, tag = 'scratch operand']
  #allocation3 [shape = 's32[2]{0}', space=sflag, size = 0x8, scoped, tag = 'scratch operand']
  #allocation6 [shape = 's32[]', space=sflag, size = 0x4, offset = 0, fixed_abs, tag = 'sflag constant byte address 0x0 - dummy sync flag']
  #allocation7 [shape = 's32[]', space=sflag, size = 0x4, offset = 0, fixed_abs, tag = 'sflag constant byte address 0x0 - dummy sync flag']
  #allocation8 [shape = 'u32[]', space=smem, size = 0x4, offset = 0x44, fixed_abs, tag = 'smem constant byte address 0x44 - assertion arg 0']
  #allocation9 [shape = 'u32[]', space=smem, size = 0x4, offset = 0x48, fixed_abs, tag = 'smem constant byte address 0x48 - assertion arg 1']
  #allocation10 [shape = 's32[]', space=sflag, size = 0x4, offset = 0, fixed_abs, tag = 'sflag constant byte address 0x0 - dummy sync flag']
  #allocation11 [shape = 's32[]', space=sflag, size = 0x4, offset = 0, fixed_abs, tag = 'sflag constant byte address 0x0 - dummy sync flag']
  %s0 = inlined_call_operand.hbm [shape: bf16[2,20,16,128], index: 0, kind: input, shape index: {}]
  %s1 = inlined_call_operand.vmem [shape: bf16[128,32], index: 1, kind: input, shape index: {}]
  %s2 = inlined_call_operand.vmem [shape: f32[1,32], index: 2, kind: input, shape index: {}]
  %s3 = inlined_call_operand.vmem [shape: f32[1,32], index: 3, kind: input, shape index: {}]
  %s4 = inlined_call_operand.vmem [shape: bf16[288,32], index: 4, kind: input, shape index: {}]
  %s5 = inlined_call_operand.vmem [shape: f32[1,32], index: 5, kind: input, shape index: {}]
  %s6 = inlined_call_operand.vmem [shape: f32[1,32], index: 6, kind: input, shape index: {}]
  %s7 = inlined_call_operand.vmem [shape: bf16[32,128], index: 7, kind: input, shape index: {}]
  %s8 = inlined_call_operand.vmem [shape: f32[1,128], index: 8, kind: input, shape index: {}]
  %s9 = inlined_call_operand.vmem [shape: f32[1,128], index: 9, kind: input, shape index: {}]
  %s10 = inlined_call_operand.hbm [shape: f32[2,16,16,128], index: 10, kind: output, shape index: {}]
  %s11 = sld [smem:[#allocation0]]
  $region85: #{tpu_custom_call.1} parent=0
    _
  %s13 = ssub.s32 1, %s11
  %s14 = scalar_select 0, %s13, %s11
  $region1: #{tpu_custom_call.1} parent=0
    #allocation4 [shape = 'u8[131072]{0}', space=vmem, size = 0x20000, scoped, tag = 'output window, operand 0']
    #allocation5 [shape = 's32[2]{0}', space=sflag, size = 0x8, scoped, tag = 'scoped memory for tpu_custom_call.1']
    %15 = vsyncpa [#allocation5], 0
    %s16 = scalar_lea.sflag [#allocation5], 1
    %17 = vsyncpa %s16, 0
    loop: start=0, step=1, limit=6
    $region2: #{tpu_custom_call.1} parent=1 // loop_pre_header
      _
    $region3: #{tpu_custom_call.1} parent=1 // loop_header
      %s19 = sphi 0, %s23
      %p20 = scmp.ge.s32.totalorder %s19, 6
      %s26 = sphi 0, %s38
      %s27 = sphi 0, %s34
      %s28 = sphi 0, %s26
      %s29 = sphi 0, %s27
      %s30 = sphi 0, %s28
      %s31 = sphi 0, %s29
      %s39 = sphi 0, %s39
      %s41 = sphi 0, %s39
      %s42 = sphi 0, %s41
      %s56 = sphi 0, %s42
      %s60 = sphi 0, %s60
      %s62 = sphi 0, %s60
      %s63 = sphi 0, %s62
      %s77 = sphi 0, %s63
      %s81 = sphi 0, %s81
      %s83 = sphi 0, %s81
      %s84 = sphi 0, %s83
      %s98 = sphi 0, %s84
      %s102 = sphi 0, %s102
      %s104 = sphi 0, %s102
      %s105 = sphi 0, %s104
      %s119 = sphi 0, %s105
      %s123 = sphi 0, %s123
      %s125 = sphi 0, %s123
      %s126 = sphi 0, %s125
      %s140 = sphi 0, %s126
      %s144 = sphi 0, %s144
      %s146 = sphi 0, %s144
      %s147 = sphi 0, %s146
      %s161 = sphi 0, %s147
      %s165 = sphi 0, %s165
      %s167 = sphi 0, %s165
      %s168 = sphi 0, %s167
      %s182 = sphi 0, %s168
      %s186 = sphi 0, %s186
      %s188 = sphi 0, %s186
      %s189 = sphi 0, %s188
      %s203 = sphi 0, %s189
      %s207 = sphi 0, %s207
      %s209 = sphi 0, %s207
      %s210 = sphi 0, %s209
      %s224 = sphi 0, %s210
      %s232 = sphi 0, %s234
      %s235 = sphi 0, %s232
      %s236 = sphi 0, %s235
      %s252 = sphi 0, %s236
    $region4: #{tpu_custom_call.1} parent=1 // loop_header_branch
      %22 = sbr.rel (%p20) target = $region8
    $region5: #{tpu_custom_call.1} parent=1 // loop_body
      %s24 = ssub.s32 %s19, 1
      %s25 = ssub.s32 %s19, 2
      %s32 = sadd.s32 1, %s27
      %p33 = scmp.ge.s32.totalorder %s32, 2
      %s34 = scalar_select %p33, 0, %s32
      %s35 = sadd.s32 1, %s26
      %s36 = scalar_select %p33, %s35, %s26
      %p37 = scmp.ge.s32.totalorder %s36, 2
      %s38 = scalar_select %p37, 0, %s36
      %s40 = sadd.s32 %s39, 1
      %p43 = scmp.eq.s32.totalorder %s19, 3
      %p44 = scmp.ne.s32.totalorder %s39, %s41
      %p45 = scmp.eq.s32.totalorder %s19, 0
      %p46 = por %p44, %p45
      %p47 = scmp.ne.s32.totalorder %s39, %s41
      %p48 = scmp.eq.s32.totalorder %s24, 3
      %p49 = por %p47, %p48
      %p50 = scmp.ne.s32.totalorder %s41, %s42
      %p51 = scmp.eq.s32.totalorder %s24, 0
      %p52 = por %p50, %p51
      %p53 = scmp.ne.s32.totalorder %s41, %s42
      %p54 = scmp.eq.s32.totalorder %s25, 3
      %p55 = por %p53, %p54
      %p57 = scmp.ne.s32.totalorder %s42, %s56
      %p58 = scmp.eq.s32.totalorder %s25, 0
      %p59 = por %p57, %p58
      %s61 = sadd.s32 %s60, 1
      %p64 = scmp.eq.s32.totalorder %s19, 3
      %p65 = scmp.ne.s32.totalorder %s60, %s62
      %p66 = scmp.eq.s32.totalorder %s19, 0
      %p67 = por %p65, %p66
      %p68 = scmp.ne.s32.totalorder %s60, %s62
      %p69 = scmp.eq.s32.totalorder %s24, 3
      %p70 = por %p68, %p69
      %p71 = scmp.ne.s32.totalorder %s62, %s63
      %p72 = scmp.eq.s32.totalorder %s24, 0
      %p73 = por %p71, %p72
      %p74 = scmp.ne.s32.totalorder %s62, %s63
      %p75 = scmp.eq.s32.totalorder %s25, 3
      %p76 = por %p74, %p75
      %p78 = scmp.ne.s32.totalorder %s63, %s77
      %p79 = scmp.eq.s32.totalorder %s25, 0
      %p80 = por %p78, %p79
      %s82 = sadd.s32 %s81, 1
      %p85 = scmp.eq.s32.totalorder %s19, 3
      %p86 = scmp.ne.s32.totalorder %s81, %s83
      %p87 = scmp.eq.s32.totalorder %s19, 0
      %p88 = por %p86, %p87
      %p89 = scmp.ne.s32.totalorder %s81, %s83
      %p90 = scmp.eq.s32.totalorder %s24, 3
      %p91 = por %p89, %p90
      %p92 = scmp.ne.s32.totalorder %s83, %s84
      %p93 = scmp.eq.s32.totalorder %s24, 0
      %p94 = por %p92, %p93
      %p95 = scmp.ne.s32.totalorder %s83, %s84
      %p96 = scmp.eq.s32.totalorder %s25, 3
      %p97 = por %p95, %p96
      %p99 = scmp.ne.s32.totalorder %s84, %s98
      %p100 = scmp.eq.s32.totalorder %s25, 0
      %p101 = por %p99, %p100
      %s103 = sadd.s32 %s102, 1
      %p106 = scmp.eq.s32.totalorder %s19, 3
      %p107 = scmp.ne.s32.totalorder %s102, %s104
      %p108 = scmp.eq.s32.totalorder %s19, 0
      %p109 = por %p107, %p108
      %p110 = scmp.ne.s32.totalorder %s102, %s104
      %p111 = scmp.eq.s32.totalorder %s24, 3
      %p112 = por %p110, %p111
      %p113 = scmp.ne.s32.totalorder %s104, %s105
      %p114 = scmp.eq.s32.totalorder %s24, 0
      %p115 = por %p113, %p114
      %p116 = scmp.ne.s32.totalorder %s104, %s105
      %p117 = scmp.eq.s32.totalorder %s25, 3
      %p118 = por %p116, %p117
      %p120 = scmp.ne.s32.totalorder %s105, %s119
      %p121 = scmp.eq.s32.totalorder %s25, 0
      %p122 = por %p120, %p121
      %s124 = sadd.s32 %s123, 1
      %p127 = scmp.eq.s32.totalorder %s19, 3
      %p128 = scmp.ne.s32.totalorder %s123, %s125
      %p129 = scmp.eq.s32.totalorder %s19, 0
      %p130 = por %p128, %p129
      %p131 = scmp.ne.s32.totalorder %s123, %s125
      %p132 = scmp.eq.s32.totalorder %s24, 3
      %p133 = por %p131, %p132
      %p134 = scmp.ne.s32.totalorder %s125, %s126
      %p135 = scmp.eq.s32.totalorder %s24, 0
      %p136 = por %p134, %p135
      %p137 = scmp.ne.s32.totalorder %s125, %s126
      %p138 = scmp.eq.s32.totalorder %s25, 3
      %p139 = por %p137, %p138
      %p141 = scmp.ne.s32.totalorder %s126, %s140
      %p142 = scmp.eq.s32.totalorder %s25, 0
      %p143 = por %p141, %p142
      %s145 = sadd.s32 %s144, 1
      %p148 = scmp.eq.s32.totalorder %s19, 3
      %p149 = scmp.ne.s32.totalorder %s144, %s146
      %p150 = scmp.eq.s32.totalorder %s19, 0
      %p151 = por %p149, %p150
      %p152 = scmp.ne.s32.totalorder %s144, %s146
      %p153 = scmp.eq.s32.totalorder %s24, 3
      %p154 = por %p152, %p153
      %p155 = scmp.ne.s32.totalorder %s146, %s147
      %p156 = scmp.eq.s32.totalorder %s24, 0
      %p157 = por %p155, %p156
      %p158 = scmp.ne.s32.totalorder %s146, %s147
      %p159 = scmp.eq.s32.totalorder %s25, 3
      %p160 = por %p158, %p159
      %p162 = scmp.ne.s32.totalorder %s147, %s161
      %p163 = scmp.eq.s32.totalorder %s25, 0
      %p164 = por %p162, %p163
      %s166 = sadd.s32 %s165, 1
      %p169 = scmp.eq.s32.totalorder %s19, 3
      %p170 = scmp.ne.s32.totalorder %s165, %s167
      %p171 = scmp.eq.s32.totalorder %s19, 0
      %p172 = por %p170, %p171
      %p173 = scmp.ne.s32.totalorder %s165, %s167
      %p174 = scmp.eq.s32.totalorder %s24, 3
      %p175 = por %p173, %p174
      %p176 = scmp.ne.s32.totalorder %s167, %s168
      %p177 = scmp.eq.s32.totalorder %s24, 0
      %p178 = por %p176, %p177
      %p179 = scmp.ne.s32.totalorder %s167, %s168
      %p180 = scmp.eq.s32.totalorder %s25, 3
      %p181 = por %p179, %p180
      %p183 = scmp.ne.s32.totalorder %s168, %s182
      %p184 = scmp.eq.s32.totalorder %s25, 0
      %p185 = por %p183, %p184
      %s187 = sadd.s32 %s186, 1
      %p190 = scmp.eq.s32.totalorder %s19, 3
      %p191 = scmp.ne.s32.totalorder %s186, %s188
      %p192 = scmp.eq.s32.totalorder %s19, 0
      %p193 = por %p191, %p192
      %p194 = scmp.ne.s32.totalorder %s186, %s188
      %p195 = scmp.eq.s32.totalorder %s24, 3
      %p196 = por %p194, %p195
      %p197 = scmp.ne.s32.totalorder %s188, %s189
      %p198 = scmp.eq.s32.totalorder %s24, 0
      %p199 = por %p197, %p198
      %p200 = scmp.ne.s32.totalorder %s188, %s189
      %p201 = scmp.eq.s32.totalorder %s25, 3
      %p202 = por %p200, %p201
      %p204 = scmp.ne.s32.totalorder %s189, %s203
      %p205 = scmp.eq.s32.totalorder %s25, 0
      %p206 = por %p204, %p205
      %s208 = sadd.s32 %s207, 1
      %p211 = scmp.eq.s32.totalorder %s19, 3
      %p212 = scmp.ne.s32.totalorder %s207, %s209
      %p213 = scmp.eq.s32.totalorder %s19, 0
      %p214 = por %p212, %p213
      %p215 = scmp.ne.s32.totalorder %s207, %s209
      %p216 = scmp.eq.s32.totalorder %s24, 3
      %p217 = por %p215, %p216
      %p218 = scmp.ne.s32.totalorder %s209, %s210
      %p219 = scmp.eq.s32.totalorder %s24, 0
      %p220 = por %p218, %p219
      %p221 = scmp.ne.s32.totalorder %s209, %s210
      %p222 = scmp.eq.s32.totalorder %s25, 3
      %p223 = por %p221, %p222
      %p225 = scmp.ne.s32.totalorder %s210, %s224
      %p226 = scmp.eq.s32.totalorder %s25, 0
      %p227 = por %p225, %p226
      %s228 = ssub.s32 %s26, %s38
      %s229 = ssub.s32 %s27, %s34
      %s230 = sor.u32 %s228, %s229
      %p231 = scmp.eq.s32.totalorder %s230, 0
      %s233 = sadd.s32 %s232, 1
      %s234 = scalar_select %p231, %s232, %s233
      %p237 = pneg %p231
      %p238 = scmp.eq.s32.totalorder %s19, 3
      %p239 = por %p237, %p238
      %p240 = scmp.ne.s32.totalorder %s232, %s235
      %p241 = scmp.eq.s32.totalorder %s19, 0
      %p242 = por %p240, %p241
      %p243 = scmp.ne.s32.totalorder %s232, %s235
      %p244 = scmp.eq.s32.totalorder %s24, 3
      %p245 = por %p243, %p244
      %p246 = scmp.ne.s32.totalorder %s235, %s236
      %p247 = scmp.eq.s32.totalorder %s24, 0
      %p248 = por %p246, %p247
      %p249 = scmp.ne.s32.totalorder %s235, %s236
      %p250 = scmp.eq.s32.totalorder %s25, 3
      %p251 = por %p249, %p250
      %p253 = scmp.ne.s32.totalorder %s236, %s252
      %p254 = scmp.eq.s32.totalorder %s25, 0
      %p255 = por %p253, %p254
      %p256 = scmp.le.s32.totalorder 1, %s19
      %p257 = scmp.lt.s32.totalorder %s19, 5
      %p258 = pnand %p256, %p257
      %p259 = pneg %p258
      // Predicated region
      $region9: #{tpu_custom_call.1} parent=5 // pred_check
        _
      $region10: #{tpu_custom_call.1} parent=5 // pred_check_branch
        %261 = sbr.rel (%p258) target = $region12
      $region11: #{tpu_custom_call.1} parent=5 // pred_region
        %s262 = ssub.s32 %s19, 1
        // Predicated region
        $region13: #{tpu_custom_call.1} parent=11 // pred_check
          %p263 = pneg %p52
        $region14: #{tpu_custom_call.1} parent=11 // pred_check_branch
          %265 = sbr.rel (%p263) target = $region16
        $region15: #{tpu_custom_call.1} parent=11 // pred_region
          _
        $region16: #{tpu_custom_call.1} parent=11 // pred_fallthru
          _
        // Predicated region
        $region17: #{tpu_custom_call.1} parent=11 // pred_check
          %p266 = pneg %p73
        $region18: #{tpu_custom_call.1} parent=11 // pred_check_branch
          %268 = sbr.rel (%p266) target = $region20
        $region19: #{tpu_custom_call.1} parent=11 // pred_region
          _
        $region20: #{tpu_custom_call.1} parent=11 // pred_fallthru
          _
        // Predicated region
        $region21: #{tpu_custom_call.1} parent=11 // pred_check
          %p269 = pneg %p94
        $region22: #{tpu_custom_call.1} parent=11 // pred_check_branch
          %271 = sbr.rel (%p269) target = $region24
        $region23: #{tpu_custom_call.1} parent=11 // pred_region
          _
        $region24: #{tpu_custom_call.1} parent=11 // pred_fallthru
          _
        // Predicated region
        $region25: #{tpu_custom_call.1} parent=11 // pred_check
          %p272 = pneg %p115
        $region26: #{tpu_custom_call.1} parent=11 // pred_check_branch
          %274 = sbr.rel (%p272) target = $region28
        $region27: #{tpu_custom_call.1} parent=11 // pred_region
          _
        $region28: #{tpu_custom_call.1} parent=11 // pred_fallthru
          _
        // Predicated region
        $region29: #{tpu_custom_call.1} parent=11 // pred_check
          %p275 = pneg %p136
        $region30: #{tpu_custom_call.1} parent=11 // pred_check_branch
          %277 = sbr.rel (%p275) target = $region32
        $region31: #{tpu_custom_call.1} parent=11 // pred_region
          _
        $region32: #{tpu_custom_call.1} parent=11 // pred_fallthru
          _
        // Predicated region
        $region33: #{tpu_custom_call.1} parent=11 // pred_check
          %p278 = pneg %p157
        $region34: #{tpu_custom_call.1} parent=11 // pred_check_branch
          %280 = sbr.rel (%p278) target = $region36
        $region35: #{tpu_custom_call.1} parent=11 // pred_region
          _
        $region36: #{tpu_custom_call.1} parent=11 // pred_fallthru
          _
        // Predicated region
        $region37: #{tpu_custom_call.1} parent=11 // pred_check
          %p281 = pneg %p178
        $region38: #{tpu_custom_call.1} parent=11 // pred_check_branch
          %283 = sbr.rel (%p281) target = $region40
        $region39: #{tpu_custom_call.1} parent=11 // pred_region
          _
        $region40: #{tpu_custom_call.1} parent=11 // pred_fallthru
          _
        // Predicated region
        $region41: #{tpu_custom_call.1} parent=11 // pred_check
          %p284 = pneg %p199
        $region42: #{tpu_custom_call.1} parent=11 // pred_check_branch
          %286 = sbr.rel (%p284) target = $region44
        $region43: #{tpu_custom_call.1} parent=11 // pred_region
          _
        $region44: #{tpu_custom_call.1} parent=11 // pred_fallthru
          _
        // Predicated region
        $region45: #{tpu_custom_call.1} parent=11 // pred_check
          %p287 = pneg %p220
        $region46: #{tpu_custom_call.1} parent=11 // pred_check_branch
          %289 = sbr.rel (%p287) target = $region48
        $region47: #{tpu_custom_call.1} parent=11 // pred_region
          _
        $region48: #{tpu_custom_call.1} parent=11 // pred_fallthru
          _
      $region12: #{tpu_custom_call.1} parent=5 // pred_fallthru
        _
      %p290 = scmp.lt.s32.totalorder %s19, 4
      // Predicated region
      $region49: #{tpu_custom_call.1} parent=5 // pred_check
        %p291 = pneg %p290
      $region50: #{tpu_custom_call.1} parent=5 // pred_check_branch
        %293 = sbr.rel (%p291) target = $region52
      $region51: #{tpu_custom_call.1} parent=5 // pred_region
        _
      $region52: #{tpu_custom_call.1} parent=5 // pred_fallthru
        _
      %p294 = scmp.le.s32.totalorder 1, %s19
      %p295 = scmp.lt.s32.totalorder %s19, 5
      %p296 = pnand %p294, %p295
      %p297 = pneg %p296
      // Predicated region
      $region53: #{tpu_custom_call.1} parent=5 // pred_check
        _
      $region54: #{tpu_custom_call.1} parent=5 // pred_check_branch
        %299 = sbr.rel (%p296) target = $region56
      $region55: #{tpu_custom_call.1} parent=5 // pred_region
        %s300 = ssub.s32 %s19, 1
        %p301 = pneg %p52
        %p302 = pneg %p49
        %p303 = pneg %p73
        %p304 = pneg %p70
        %p305 = pneg %p94
        %p306 = pneg %p91
        %p307 = pneg %p115
        %p308 = pneg %p112
        %p309 = pneg %p136
        %p310 = pneg %p133
        %p311 = pneg %p157
        %p312 = pneg %p154
        %p313 = pneg %p178
        %p314 = pneg %p175
        %p315 = pneg %p199
        %p316 = pneg %p196
        %p317 = pneg %p220
        %p318 = pneg %p217
        %p319 = pneg %p248
        %p320 = pneg %p245
        %s321 = sand.u32 %s235, 1
        %s322 = scalar_lea.sflag [#allocation5], %s321
        %s323 = sand.u32 %s235, 1
        %s324 = smul.addr %s323, 128
        %s325 = scalar_lea.vmem [#allocation4], %s324
        %s326 = smul.u32 8, %s29
        %s328 = sand.u32 %s29, 1
        %p329 = scmp.eq.s32.totalorder %s29, 0
        // Predicated region
        $region57: #{tpu_custom_call.1} parent=55 // pred_check
          %p330 = pneg %p329
        $region58: #{tpu_custom_call.1} parent=55 // pred_check_branch
          %332 = sbr.rel (%p330) target = $region60
        $region59: #{tpu_custom_call.1} parent=55 // pred_region
          %s333 = smul.u32 %s29, 8
          %s334 = smul.u32 %s333, 2
          %s335 = smul.u32 %s28, 40
          %s336 = sadd.s32 %s334, %s335
          %s337 = smul.addr %s336, 4
          %s338 = scalar_lea.hbm %s0, %s337
          // Predicated region
          $region61: #{tpu_custom_call.1} parent=59 // pred_check
            _
          $region62: #{tpu_custom_call.1} parent=59 // pred_check_branch
            %340 = sbr.rel target = $region64
          $region63: #{tpu_custom_call.1} parent=59 // pred_region
            %341 = sst [smem:[#allocation8]] [#allocation7]
            %342 = sst [smem:[#allocation9]] [#allocation6]
          $region64: #{tpu_custom_call.1} parent=59 // pred_fallthru
            _
          %344 = shalt.err (0)
          %s346 = sshll.u32 %s338, 4
          %s347 = int_to_ptr.hbm [resolvable:$true] %s346
          %s348 = sshll.u32 [#allocation2], 4
          %s349 = int_to_ptr.vmem [resolvable:$true] %s348
          %351 = dma.hbm_to_vmem [thread:$0]  %s347, 1536, %s349, [#allocation3]
        $region60: #{tpu_custom_call.1} parent=55 // pred_fallthru
          _
        %s352 = smul.u32 %s29, 8
        %s353 = smul.u32 %s328, 24
        %s354 = smul.addr %s353, 4
        %s355 = scalar_lea.vmem [#allocation2], %s354
        %s356 = scalar_lea.sflag [#allocation3], %s328
        %s357 = smul.u32 4, 12
        %s358 = smul.u32 %s357, 2
        %s359 = smul.u32 %s358, 1
        %s360 = sshll.u32 %s359, 4
        %361 = dma.done %s356, %s360
        %s362 = sadd.s32 %s29, 1
        %p363 = scmp.lt.s32.totalorder %s362, 2
        // Predicated region
        $region65: #{tpu_custom_call.1} parent=55 // pred_check
          %p364 = pneg %p363
        $region66: #{tpu_custom_call.1} parent=55 // pred_check_branch
          %366 = sbr.rel (%p364) target = $region68
        $region67: #{tpu_custom_call.1} parent=55 // pred_region
          %s367 = ssub.s32 1, %s328
          %s368 = smul.u32 %s362, 8
          %s369 = smul.u32 %s368, 2
          %s370 = smul.u32 %s28, 40
          %s371 = sadd.s32 %s369, %s370
          %s372 = smul.addr %s371, 4
          %s373 = scalar_lea.hbm %s0, %s372
          %s374 = smul.u32 %s367, 24
          %s375 = smul.addr %s374, 4
          %s376 = scalar_lea.vmem [#allocation2], %s375
          %s377 = scalar_lea.sflag [#allocation3], %s367
          // Predicated region
          $region69: #{tpu_custom_call.1} parent=67 // pred_check
            _
          $region70: #{tpu_custom_call.1} parent=67 // pred_check_branch
            %379 = sbr.rel target = $region72
          $region71: #{tpu_custom_call.1} parent=67 // pred_region
            %380 = sst [smem:[#allocation8]] [#allocation11]
            %381 = sst [smem:[#allocation9]] [#allocation10]
          $region72: #{tpu_custom_call.1} parent=67 // pred_fallthru
            _
          %383 = shalt.err (0)
          %s385 = sshll.u32 %s373, 4
          %s386 = int_to_ptr.hbm [resolvable:$true] %s385
          %s387 = sshll.u32 %s376, 4
          %s388 = int_to_ptr.vmem [resolvable:$true] %s387
          %390 = dma.hbm_to_vmem [thread:$0]  %s386, 1536, %s388, %s377
        $region68: #{tpu_custom_call.1} parent=55 // pred_fallthru
          _
        %v391 = vld [vmem:[%s355] sm:$0xf]
        %v392 = vld [vmem:[%s355 + $0x4] sm:$0xf]
        %v393 = vld [vmem:[%s355 + $0x8] sm:$0xf]
        %v394 = vld [vmem:[%s355 + $0xc] sm:$0xf]
        %v395 = vld [vmem:[%s355 + $0x10] sm:$0xf]
        %v396 = vld [vmem:[%s355 + $0x14] sm:$0xf]
        %v397 = vld [vmem:[%s355 + $0x18] sm:$0xf]
        %v398 = vld [vmem:[%s355 + $0x1c] sm:$0xf]
        %v399 = vld [vmem:[%s355 + $0x20] sm:$0xf]
        %v400 = vld [vmem:[%s355 + $0x24] sm:$0xf]
        %v401 = vld [vmem:[%s355 + $0x28] sm:$0xf]
        %v402 = vld [vmem:[%s355 + $0x2c] sm:$0xf]
        %v403 = vld [vmem:[%s355 + $0x30] sm:$0xf]
        %v404 = vld [vmem:[%s355 + $0x34] sm:$0xf]
        %v405 = vld [vmem:[%s355 + $0x38] sm:$0xf]
        %v406 = vld [vmem:[%s355 + $0x3c] sm:$0xf]
        %v407 = vld [vmem:[%s355 + $0x40] sm:$0xf]
        %v408 = vld [vmem:[%s355 + $0x44] sm:$0xf]
        %v409 = vld [vmem:[%s355 + $0x48] sm:$0xf]
        %v410 = vld [vmem:[%s355 + $0x4c] sm:$0xf]
        %v411 = vld [vmem:[%s355 + $0x50] sm:$0xf]
        %v412 = vld [vmem:[%s355 + $0x54] sm:$0xf]
        %v413 = vld [vmem:[%s355 + $0x58] sm:$0xf]
        %v414 = vld [vmem:[%s355 + $0x5c] sm:$0xf]
        %v415 = vld [vmem:[%s1] sm:$0xf]
        %v416 = vld [vmem:[%s1 + $0x4] sm:$0xf]
        %v417 = vld [vmem:[%s1 + $0x8] sm:$0xf]
        %v418 = vld [vmem:[%s1 + $0xc] sm:$0xf]
        %v419 = vld [vmem:[%s1 + $0x10] sm:$0xf]
        %v420 = vld [vmem:[%s1 + $0x14] sm:$0xf]
        %v421 = vld [vmem:[%s1 + $0x18] sm:$0xf]
        %v422 = vld [vmem:[%s1 + $0x1c] sm:$0xf]
        %v423 = vld [vmem:[%s1 + $0x20] sm:$0xf]
        %v424 = vld [vmem:[%s1 + $0x24] sm:$0xf]
        %v425 = vld [vmem:[%s1 + $0x28] sm:$0xf]
        %v426 = vld [vmem:[%s1 + $0x2c] sm:$0xf]
        %v427 = vld [vmem:[%s1 + $0x30] sm:$0xf]
        %v428 = vld [vmem:[%s1 + $0x34] sm:$0xf]
        %v429 = vld [vmem:[%s1 + $0x38] sm:$0xf]
        %v430 = vld [vmem:[%s1 + $0x3c] sm:$0xf]
        %v455 = vunpack.c.l.b16 %v391
        %v456 = vunpack.c.l.b16 %v392
        %v457 = vunpack.c.l.b16 %v393
        %v458 = vunpack.c.l.b16 %v394
        %v459 = vunpack.c.l.b16 %v395
        %v460 = vunpack.c.l.b16 %v396
        %v461 = vunpack.c.l.b16 %v397
        %v462 = vunpack.c.l.b16 %v398
        %v463 = vunpack.c.l.b16 %v399
        %v464 = vunpack.c.l.b16 %v400
        %v465 = vunpack.c.l.b16 %v401
        %v466 = vunpack.c.l.b16 %v402
        %v467 = vunpack.c.l.b16 %v403
        %v468 = vunpack.c.l.b16 %v404
        %v469 = vunpack.c.l.b16 %v405
        %v470 = vunpack.c.l.b16 %v406
        %v471 = vunpack.c.l.b16 %v407
        %v472 = vunpack.c.l.b16 %v408
        %v473 = vunpack.c.l.b16 %v409
        %v474 = vunpack.c.l.b16 %v410
        %v475 = vunpack.c.l.b16 %v411
        %v476 = vunpack.c.l.b16 %v412
        %v477 = vunpack.c.l.b16 %v413
        %v478 = vunpack.c.l.b16 %v414
        %v479 = vpack.c.b16 %v456, %v455
        %v480 = vpack.c.b16 %v458, %v457
        %v481 = vpack.c.b16 %v460, %v459
        %v482 = vpack.c.b16 %v462, %v461
        %v483 = vpack.c.b16 %v464, %v463
        %v484 = vpack.c.b16 %v466, %v465
        %v485 = vpack.c.b16 %v468, %v467
        %v486 = vpack.c.b16 %v470, %v469
        %v487 = vpack.c.b16 %v472, %v471
        %v488 = vpack.c.b16 %v474, %v473
        %v489 = vpack.c.b16 %v476, %v475
        %v490 = vpack.c.b16 %v478, %v477
        %v519 = vunpack.c.l.b16 %v415
        %v520 = vunpack.c.l.b16 %v416
        %v521 = vunpack.c.l.b16 %v417
        %v522 = vunpack.c.l.b16 %v418
        %v523 = vunpack.c.l.b16 %v419
        %v524 = vunpack.c.l.b16 %v420
        %v525 = vunpack.c.l.b16 %v421
        %v526 = vunpack.c.l.b16 %v422
        %v527 = vunpack.c.l.b16 %v423
        %v528 = vunpack.c.l.b16 %v424
        %v529 = vunpack.c.l.b16 %v425
        %v530 = vunpack.c.l.b16 %v426
        %v531 = vunpack.c.l.b16 %v427
        %v532 = vunpack.c.l.b16 %v428
        %v533 = vunpack.c.l.b16 %v429
        %v534 = vunpack.c.l.b16 %v430
        %v535 = vpack.c.b16 %v520, %v519
        %v536 = vpack.c.b16 %v522, %v521
        %v537 = vpack.c.b16 %v524, %v523
        %v538 = vpack.c.b16 %v526, %v525
        %v539 = vpack.c.b16 %v528, %v527
        %v540 = vpack.c.b16 %v530, %v529
        %v541 = vpack.c.b16 %v532, %v531
        %v542 = vpack.c.b16 %v534, %v533
        %551 = vmatpush.bf16.msra.mxu0 %v542
        %552 = vmatpush.bf16.msra.mxu0 %v541
        %553 = vmatpush.bf16.msra.mxu0 %v540
        %554 = vmatpush.bf16.msra.mxu0 %v539
        %555 = vmatpush.bf16.msra.mxu0 %v538
        %556 = vmatpush.bf16.msra.mxu0 %v537
        %557 = vmatpush.bf16.msra.mxu0 %v536
        %558 = vmatpush.bf16.msra.mxu0 %v535
        %559 = vmatmul.bf16.gmra.mxu0 %v479
        %v560 = vpop.f32.mrf.mxu0
        %v561 = vadd.f32 0.0, %v560
        %v562 = vpop.f32.mrf.mxu0
        %v563 = vadd.f32 0.0, %v562
        %564 = vmatmul.bf16.gmra.mxu0 %v480
        %v565 = vpop.f32.mrf.mxu0
        %v566 = vadd.f32 0.0, %v565
        %v567 = vpop.f32.mrf.mxu0
        %v568 = vadd.f32 0.0, %v567
        %569 = vmatmul.bf16.gmra.mxu0 %v481
        %v570 = vpop.f32.mrf.mxu0
        %v571 = vadd.f32 0.0, %v570
        %v572 = vpop.f32.mrf.mxu0
        %v573 = vadd.f32 0.0, %v572
        %574 = vmatmul.bf16.gmra.mxu0 %v482
        %v575 = vpop.f32.mrf.mxu0
        %v576 = vadd.f32 0.0, %v575
        %v577 = vpop.f32.mrf.mxu0
        %v578 = vadd.f32 0.0, %v577
        %579 = vmatmul.bf16.gmra.mxu0 %v483
        %v580 = vpop.f32.mrf.mxu0
        %v581 = vadd.f32 0.0, %v580
        %v582 = vpop.f32.mrf.mxu0
        %v583 = vadd.f32 0.0, %v582
        %584 = vmatmul.bf16.gmra.mxu0 %v484
        %v585 = vpop.f32.mrf.mxu0
        %v586 = vadd.f32 0.0, %v585
        %v587 = vpop.f32.mrf.mxu0
        %v588 = vadd.f32 0.0, %v587
        %589 = vmatmul.bf16.gmra.mxu0 %v485
        %v590 = vpop.f32.mrf.mxu0
        %v591 = vadd.f32 0.0, %v590
        %v592 = vpop.f32.mrf.mxu0
        %v593 = vadd.f32 0.0, %v592
        %594 = vmatmul.bf16.gmra.mxu0 %v486
        %v595 = vpop.f32.mrf.mxu0
        %v596 = vadd.f32 0.0, %v595
        %v597 = vpop.f32.mrf.mxu0
        %v598 = vadd.f32 0.0, %v597
        %599 = vmatmul.bf16.gmra.mxu0 %v487
        %v600 = vpop.f32.mrf.mxu0
        %v601 = vadd.f32 0.0, %v600
        %v602 = vpop.f32.mrf.mxu0
        %v603 = vadd.f32 0.0, %v602
        %604 = vmatmul.bf16.gmra.mxu0 %v488
        %v605 = vpop.f32.mrf.mxu0
        %v606 = vadd.f32 0.0, %v605
        %v607 = vpop.f32.mrf.mxu0
        %v608 = vadd.f32 0.0, %v607
        %609 = vmatmul.bf16.gmra.mxu0 %v489
        %v610 = vpop.f32.mrf.mxu0
        %v611 = vadd.f32 0.0, %v610
        %v612 = vpop.f32.mrf.mxu0
        %v613 = vadd.f32 0.0, %v612
        %614 = vmatmul.bf16.gmra.mxu0 %v490
        %v615 = vpop.f32.mrf.mxu0
        %v616 = vadd.f32 0.0, %v615
        %v617 = vpop.f32.mrf.mxu0
        %v618 = vadd.f32 0.0, %v617
        %619 = vdwg.mxu0
        %v620 = vld [vmem:[%s2] sm:$0x1]
        %v622 = vperm.slane %v620, 0
        %v624 = vmul.f32 %v561, %v622
        %v625 = vmul.f32 %v563, %v622
        %v626 = vmul.f32 %v566, %v622
        %v627 = vmul.f32 %v568, %v622
        %v628 = vmul.f32 %v571, %v622
        %v629 = vmul.f32 %v573, %v622
        %v630 = vmul.f32 %v576, %v622
        %v631 = vmul.f32 %v578, %v622
        %v632 = vmul.f32 %v581, %v622
        %v633 = vmul.f32 %v583, %v622
        %v634 = vmul.f32 %v586, %v622
        %v635 = vmul.f32 %v588, %v622
        %v636 = vmul.f32 %v591, %v622
        %v637 = vmul.f32 %v593, %v622
        %v638 = vmul.f32 %v596, %v622
        %v639 = vmul.f32 %v598, %v622
        %v640 = vmul.f32 %v601, %v622
        %v641 = vmul.f32 %v603, %v622
        %v642 = vmul.f32 %v606, %v622
        %v643 = vmul.f32 %v608, %v622
        %v644 = vmul.f32 %v611, %v622
        %v645 = vmul.f32 %v613, %v622
        %v646 = vmul.f32 %v616, %v622
        %v647 = vmul.f32 %v618, %v622
        %v648 = vld [vmem:[%s3] sm:$0x1]
        %v650 = vperm.slane %v648, 0
        %v652 = vadd.f32 %v624, %v650
        %v653 = vadd.f32 %v625, %v650
        %v654 = vadd.f32 %v626, %v650
        %v655 = vadd.f32 %v627, %v650
        %v656 = vadd.f32 %v628, %v650
        %v657 = vadd.f32 %v629, %v650
        %v658 = vadd.f32 %v630, %v650
        %v659 = vadd.f32 %v631, %v650
        %v660 = vadd.f32 %v632, %v650
        %v661 = vadd.f32 %v633, %v650
        %v662 = vadd.f32 %v634, %v650
        %v663 = vadd.f32 %v635, %v650
        %v664 = vadd.f32 %v636, %v650
        %v665 = vadd.f32 %v637, %v650
        %v666 = vadd.f32 %v638, %v650
        %v667 = vadd.f32 %v639, %v650
        %v668 = vadd.f32 %v640, %v650
        %v669 = vadd.f32 %v641, %v650
        %v670 = vadd.f32 %v642, %v650
        %v671 = vadd.f32 %v643, %v650
        %v672 = vadd.f32 %v644, %v650
        %v673 = vadd.f32 %v645, %v650
        %v674 = vadd.f32 %v646, %v650
        %v675 = vadd.f32 %v647, %v650
        %v676 = vmax.f32 %v652, 0.0
        %v677 = vmax.f32 %v653, 0.0
        %v678 = vmax.f32 %v654, 0.0
        %v679 = vmax.f32 %v655, 0.0
        %v680 = vmax.f32 %v656, 0.0
        %v681 = vmax.f32 %v657, 0.0
        %v682 = vmax.f32 %v658, 0.0
        %v683 = vmax.f32 %v659, 0.0
        %v684 = vmax.f32 %v660, 0.0
        %v685 = vmax.f32 %v661, 0.0
        %v686 = vmax.f32 %v662, 0.0
        %v687 = vmax.f32 %v663, 0.0
        %v688 = vmax.f32 %v664, 0.0
        %v689 = vmax.f32 %v665, 0.0
        %v690 = vmax.f32 %v666, 0.0
        %v691 = vmax.f32 %v667, 0.0
        %v692 = vmax.f32 %v668, 0.0
        %v693 = vmax.f32 %v669, 0.0
        %v694 = vmax.f32 %v670, 0.0
        %v695 = vmax.f32 %v671, 0.0
        %v696 = vmax.f32 %v672, 0.0
        %v697 = vmax.f32 %v673, 0.0
        %v698 = vmax.f32 %v674, 0.0
        %v699 = vmax.f32 %v675, 0.0
        %s700 = ssub.s32 %s352, 2
        %v701 = vstv %s700
        %v702 = vadd.s32 %v701, 1
        %v703 = vadd.s32 %v701, 2
        %v704 = vadd.s32 %v701, 3
        %v705 = vadd.s32 %v701, 4
        %v706 = vadd.s32 %v701, 5
        %v707 = vadd.s32 %v701, 6
        %v708 = vadd.s32 %v701, 7
        %v709 = vadd.s32 %v701, 8
        %v710 = vadd.s32 %v701, 9
        %v711 = vadd.s32 %v701, 10
        %v712 = vadd.s32 %v701, 11
        %vm713 = vcmp.ge.s32.totalorder %v701, 0
        %vm714 = vcmp.ge.s32.totalorder %v702, 0
        %vm715 = vcmp.ge.s32.totalorder %v703, 0
        %vm716 = vcmp.ge.s32.totalorder %v704, 0
        %vm717 = vcmp.ge.s32.totalorder %v705, 0
        %vm718 = vcmp.ge.s32.totalorder %v706, 0
        %vm719 = vcmp.ge.s32.totalorder %v707, 0
        %vm720 = vcmp.ge.s32.totalorder %v708, 0
        %vm721 = vcmp.ge.s32.totalorder %v709, 0
        %vm722 = vcmp.ge.s32.totalorder %v710, 0
        %vm723 = vcmp.ge.s32.totalorder %v711, 0
        %vm724 = vcmp.ge.s32.totalorder %v712, 0
        %vm725 = vcmp.lt.s32.totalorder %v701, 16
        %vm726 = vcmp.lt.s32.totalorder %v702, 16
        %vm727 = vcmp.lt.s32.totalorder %v703, 16
        %vm728 = vcmp.lt.s32.totalorder %v704, 16
        %vm729 = vcmp.lt.s32.totalorder %v705, 16
        %vm730 = vcmp.lt.s32.totalorder %v706, 16
        %vm731 = vcmp.lt.s32.totalorder %v707, 16
        %vm732 = vcmp.lt.s32.totalorder %v708, 16
        %vm733 = vcmp.lt.s32.totalorder %v709, 16
        %vm734 = vcmp.lt.s32.totalorder %v710, 16
        %vm735 = vcmp.lt.s32.totalorder %v711, 16
        %vm736 = vcmp.lt.s32.totalorder %v712, 16
        %vm737 = vmand %vm713, %vm725
        %vm738 = vmand %vm714, %vm726
        %vm739 = vmand %vm715, %vm727
        %vm740 = vmand %vm716, %vm728
        %vm741 = vmand %vm717, %vm729
        %vm742 = vmand %vm718, %vm730
        %vm743 = vmand %vm719, %vm731
        %vm744 = vmand %vm720, %vm732
        %vm745 = vmand %vm721, %vm733
        %vm746 = vmand %vm722, %vm734
        %vm747 = vmand %vm723, %vm735
        %vm748 = vmand %vm724, %vm736
        %v749 = vsel %vm737, 1, 0
        %v750 = vsel %vm738, 1, 0
        %v751 = vsel %vm739, 1, 0
        %v752 = vsel %vm740, 1, 0
        %v753 = vsel %vm741, 1, 0
        %v754 = vsel %vm742, 1, 0
        %v755 = vsel %vm743, 1, 0
        %v756 = vsel %vm744, 1, 0
        %v757 = vsel %vm745, 1, 0
        %v758 = vsel %vm746, 1, 0
        %v759 = vsel %vm747, 1, 0
        %v760 = vsel %vm748, 1, 0
        %vm761 = vcmp.eq.s32.totalorder %v749, 1
        %vm762 = vcmp.eq.s32.totalorder %v750, 1
        %vm763 = vcmp.eq.s32.totalorder %v751, 1
        %vm764 = vcmp.eq.s32.totalorder %v752, 1
        %vm765 = vcmp.eq.s32.totalorder %v753, 1
        %vm766 = vcmp.eq.s32.totalorder %v754, 1
        %vm767 = vcmp.eq.s32.totalorder %v755, 1
        %vm768 = vcmp.eq.s32.totalorder %v756, 1
        %vm769 = vcmp.eq.s32.totalorder %v757, 1
        %vm770 = vcmp.eq.s32.totalorder %v758, 1
        %vm771 = vcmp.eq.s32.totalorder %v759, 1
        %vm772 = vcmp.eq.s32.totalorder %v760, 1
        %v773 = vsel %vm761, %v676, 0.0
        %v774 = vsel %vm761, %v677, 0.0
        %v775 = vsel %vm762, %v678, 0.0
        %v776 = vsel %vm762, %v679, 0.0
        %v777 = vsel %vm763, %v680, 0.0
        %v778 = vsel %vm763, %v681, 0.0
        %v779 = vsel %vm764, %v682, 0.0
        %v780 = vsel %vm764, %v683, 0.0
        %v781 = vsel %vm765, %v684, 0.0
        %v782 = vsel %vm765, %v685, 0.0
        %v783 = vsel %vm766, %v686, 0.0
        %v784 = vsel %vm766, %v687, 0.0
        %v785 = vsel %vm767, %v688, 0.0
        %v786 = vsel %vm767, %v689, 0.0
        %v787 = vsel %vm768, %v690, 0.0
        %v788 = vsel %vm768, %v691, 0.0
        %v789 = vsel %vm769, %v692, 0.0
        %v790 = vsel %vm769, %v693, 0.0
        %v791 = vsel %vm770, %v694, 0.0
        %v792 = vsel %vm770, %v695, 0.0
        %v793 = vsel %vm771, %v696, 0.0
        %v794 = vsel %vm771, %v697, 0.0
        %v795 = vsel %vm772, %v698, 0.0
        %v796 = vsel %vm772, %v699, 0.0
        %v797 = vpack.c.bf16 %v773, %v773
        %v798 = vpack.c.bf16 %v774, %v774
        %v799 = vpack.c.bf16 %v775, %v775
        %v800 = vpack.c.bf16 %v776, %v776
        %v801 = vpack.c.bf16 %v777, %v777
        %v802 = vpack.c.bf16 %v778, %v778
        %v803 = vpack.c.bf16 %v779, %v779
        %v804 = vpack.c.bf16 %v780, %v780
        %v805 = vpack.c.bf16 %v781, %v781
        %v806 = vpack.c.bf16 %v782, %v782
        %v807 = vpack.c.bf16 %v783, %v783
        %v808 = vpack.c.bf16 %v784, %v784
        %v809 = vpack.c.bf16 %v785, %v785
        %v810 = vpack.c.bf16 %v786, %v786
        %v811 = vpack.c.bf16 %v787, %v787
        %v812 = vpack.c.bf16 %v788, %v788
        %v813 = vpack.c.bf16 %v789, %v789
        %v814 = vpack.c.bf16 %v790, %v790
        %v815 = vpack.c.bf16 %v791, %v791
        %v816 = vpack.c.bf16 %v792, %v792
        %v817 = vpack.c.bf16 %v793, %v793
        %v818 = vpack.c.bf16 %v794, %v794
        %v819 = vpack.c.bf16 %v795, %v795
        %v820 = vpack.c.bf16 %v796, %v796
        %v845 = vunpack.c.l.b16 %v797
        %v846 = vunpack.c.l.b16 %v798
        %v847 = vunpack.c.l.b16 %v799
        %v848 = vunpack.c.l.b16 %v800
        %v849 = vunpack.c.l.b16 %v801
        %v850 = vunpack.c.l.b16 %v802
        %v851 = vunpack.c.l.b16 %v803
        %v852 = vunpack.c.l.b16 %v804
        %v853 = vunpack.c.l.b16 %v805
        %v854 = vunpack.c.l.b16 %v806
        %v855 = vunpack.c.l.b16 %v807
        %v856 = vunpack.c.l.b16 %v808
        %v857 = vunpack.c.l.b16 %v809
        %v858 = vunpack.c.l.b16 %v810
        %v859 = vunpack.c.l.b16 %v811
        %v860 = vunpack.c.l.b16 %v812
        %v861 = vunpack.c.l.b16 %v813
        %v862 = vunpack.c.l.b16 %v814
        %v863 = vunpack.c.l.b16 %v815
        %v864 = vunpack.c.l.b16 %v816
        %v865 = vunpack.c.l.b16 %v817
        %v866 = vunpack.c.l.b16 %v818
        %v867 = vunpack.c.l.b16 %v819
        %v868 = vunpack.c.l.b16 %v820
        %v869 = vpack.c.b16 %v846, %v845
        %v870 = vpack.c.b16 %v848, %v847
        %v871 = vpack.c.b16 %v850, %v849
        %v872 = vpack.c.b16 %v852, %v851
        %v873 = vpack.c.b16 %v854, %v853
        %v874 = vpack.c.b16 %v856, %v855
        %v875 = vpack.c.b16 %v858, %v857
        %v876 = vpack.c.b16 %v860, %v859
        %v877 = vpack.c.b16 %v862, %v861
        %v878 = vpack.c.b16 %v864, %v863
        %v879 = vpack.c.b16 %v866, %v865
        %v880 = vpack.c.b16 %v868, %v867
        %v881 = vrot.slane %v869, 7
        %v882 = vrot.slane %v870, 7
        %v883 = vrot.slane %v871, 7
        %v884 = vrot.slane %v872, 7
        %v885 = vrot.slane %v873, 7
        %v886 = vrot.slane %v874, 7
        %v887 = vrot.slane %v875, 7
        %v888 = vrot.slane %v876, 7
        %v889 = vrot.slane %v877, 7
        %v890 = vrot.slane %v878, 7
        %v891 = vrot.slane %v879, 7
        %v892 = vrot.slane %v880, 7
        %vm893 = vcmask 1040384
        %v896 = vsel %vm893, 0, %v881
        %v898 = vsel %vm893, 0, %v882
        %v900 = vsel %vm893, 0, %v883
        %v902 = vsel %vm893, 0, %v884
        %v904 = vsel %vm893, 0, %v885
        %v906 = vsel %vm893, 0, %v886
        %v908 = vsel %vm893, 0, %v887
        %v910 = vsel %vm893, 0, %v888
        %v912 = vsel %vm893, 0, %v889
        %v914 = vsel %vm893, 0, %v890
        %v916 = vsel %vm893, 0, %v891
        %v918 = vsel %vm893, 0, %v892
        %v919 = vsel %vm893, %v881, 0
        %v920 = vsel %vm893, %v882, 0
        %v921 = vsel %vm893, %v883, 0
        %v922 = vsel %vm893, %v884, 0
        %v923 = vsel %vm893, %v885, 0
        %v924 = vsel %vm893, %v886, 0
        %v925 = vsel %vm893, %v887, 0
        %v926 = vsel %vm893, %v888, 0
        %v927 = vsel %vm893, %v889, 0
        %v928 = vsel %vm893, %v890, 0
        %v929 = vsel %vm893, %v891, 0
        %v930 = vsel %vm893, %v892, 0
        %vm947 = vcmask 1046528
        %v948 = vrot.slane %v896, 1
        %v949 = vrot.slane %v919, 1
        %v950 = vsel %vm947, %v948, %v949
        %v951 = vrot.slane %v898, 1
        %v952 = vrot.slane %v920, 1
        %v953 = vsel %vm947, %v951, %v952
        %v954 = vrot.slane %v900, 1
        %v955 = vrot.slane %v921, 1
        %v956 = vsel %vm947, %v954, %v955
        %v957 = vrot.slane %v902, 1
        %v958 = vrot.slane %v922, 1
        %v959 = vsel %vm947, %v957, %v958
        %v960 = vrot.slane %v904, 1
        %v961 = vrot.slane %v923, 1
        %v962 = vsel %vm947, %v960, %v961
        %v963 = vrot.slane %v906, 1
        %v964 = vrot.slane %v924, 1
        %v965 = vsel %vm947, %v963, %v964
        %v966 = vrot.slane %v908, 1
        %v967 = vrot.slane %v925, 1
        %v968 = vsel %vm947, %v966, %v967
        %v969 = vrot.slane %v910, 1
        %v970 = vrot.slane %v926, 1
        %v971 = vsel %vm947, %v969, %v970
        %972 = vrot.lane.b32.xlu0 %v950, 32
        %v973 = vpop.permute.xlu0 %972
        %974 = vrot.lane.b32.xlu0 %v953, 32
        %v975 = vpop.permute.xlu0 %974
        %976 = vrot.lane.b32.xlu0 %v956, 32
        %v977 = vpop.permute.xlu0 %976
        %978 = vrot.lane.b32.xlu0 %v959, 32
        %v979 = vpop.permute.xlu0 %978
        %980 = vrot.lane.b32.xlu0 %v962, 32
        %v981 = vpop.permute.xlu0 %980
        %982 = vrot.lane.b32.xlu0 %v965, 32
        %v983 = vpop.permute.xlu0 %982
        %984 = vrot.lane.b32.xlu0 %v968, 32
        %v985 = vpop.permute.xlu0 %984
        %986 = vrot.lane.b32.xlu0 %v971, 32
        %v987 = vpop.permute.xlu0 %986
        %vm988 = vcmask 1045504
        %v989 = vrot.slane %v896, 2
        %v990 = vrot.slane %v919, 2
        %v991 = vsel %vm988, %v989, %v990
        %v992 = vrot.slane %v898, 2
        %v993 = vrot.slane %v920, 2
        %v994 = vsel %vm988, %v992, %v993
        %v995 = vrot.slane %v900, 2
        %v996 = vrot.slane %v921, 2
        %v997 = vsel %vm988, %v995, %v996
        %v998 = vrot.slane %v902, 2
        %v999 = vrot.slane %v922, 2
        %v1000 = vsel %vm988, %v998, %v999
        %v1001 = vrot.slane %v904, 2
        %v1002 = vrot.slane %v923, 2
        %v1003 = vsel %vm988, %v1001, %v1002
        %v1004 = vrot.slane %v906, 2
        %v1005 = vrot.slane %v924, 2
        %v1006 = vsel %vm988, %v1004, %v1005
        %v1007 = vrot.slane %v908, 2
        %v1008 = vrot.slane %v925, 2
        %v1009 = vsel %vm988, %v1007, %v1008
        %v1010 = vrot.slane %v910, 2
        %v1011 = vrot.slane %v926, 2
        %v1012 = vsel %vm988, %v1010, %v1011
        %1013 = vrot.lane.b32.xlu0 %v991, 64
        %v1014 = vpop.permute.xlu0 %1013
        %1015 = vrot.lane.b32.xlu0 %v994, 64
        %v1016 = vpop.permute.xlu0 %1015
        %1017 = vrot.lane.b32.xlu0 %v997, 64
        %v1018 = vpop.permute.xlu0 %1017
        %1019 = vrot.lane.b32.xlu0 %v1000, 64
        %v1020 = vpop.permute.xlu0 %1019
        %1021 = vrot.lane.b32.xlu0 %v1003, 64
        %v1022 = vpop.permute.xlu0 %1021
        %1023 = vrot.lane.b32.xlu0 %v1006, 64
        %v1024 = vpop.permute.xlu0 %1023
        %1025 = vrot.lane.b32.xlu0 %v1009, 64
        %v1026 = vpop.permute.xlu0 %1025
        %1027 = vrot.lane.b32.xlu0 %v1012, 64
        %v1028 = vpop.permute.xlu0 %1027
        %1031 = vrot.lane.b32.xlu0 %v900, 96
        %v1032 = vpop.permute.xlu0 %1031
        %1033 = vrot.lane.b32.xlu0 %v902, 96
        %v1034 = vpop.permute.xlu0 %1033
        %1035 = vrot.lane.b32.xlu0 %v904, 96
        %v1036 = vpop.permute.xlu0 %1035
        %1037 = vrot.lane.b32.xlu0 %v906, 96
        %v1038 = vpop.permute.xlu0 %1037
        %1039 = vrot.lane.b32.xlu0 %v908, 96
        %v1040 = vpop.permute.xlu0 %1039
        %1041 = vrot.lane.b32.xlu0 %v910, 96
        %v1042 = vpop.permute.xlu0 %1041
        %1043 = vrot.lane.b32.xlu0 %v912, 96
        %v1044 = vpop.permute.xlu0 %1043
        %1045 = vrot.lane.b32.xlu0 %v914, 96
        %v1046 = vpop.permute.xlu0 %1045
        %v1049 = vrot.slane %v912, 1
        %v1050 = vrot.slane %v927, 1
        %v1051 = vsel %vm947, %v1049, %v1050
        %v1052 = vrot.slane %v914, 1
        %v1053 = vrot.slane %v928, 1
        %v1054 = vsel %vm947, %v1052, %v1053
        %v1055 = vrot.slane %v912, 2
        %v1056 = vrot.slane %v927, 2
        %v1057 = vsel %vm988, %v1055, %v1056
        %v1058 = vrot.slane %v914, 2
        %v1059 = vrot.slane %v928, 2
        %v1060 = vsel %vm988, %v1058, %v1059
        %1061 = vrot.lane.b32.xlu0 %v997, 32
        %v1062 = vpop.permute.xlu0 %1061
        %1063 = vrot.lane.b32.xlu0 %v1000, 32
        %v1064 = vpop.permute.xlu0 %1063
        %1065 = vrot.lane.b32.xlu0 %v1003, 32
        %v1066 = vpop.permute.xlu0 %1065
        %1067 = vrot.lane.b32.xlu0 %v1006, 32
        %v1068 = vpop.permute.xlu0 %1067
        %1069 = vrot.lane.b32.xlu0 %v1009, 32
        %v1070 = vpop.permute.xlu0 %1069
        %1071 = vrot.lane.b32.xlu0 %v1012, 32
        %v1072 = vpop.permute.xlu0 %1071
        %1073 = vrot.lane.b32.xlu0 %v1057, 32
        %v1074 = vpop.permute.xlu0 %1073
        %1075 = vrot.lane.b32.xlu0 %v1060, 32
        %v1076 = vpop.permute.xlu0 %1075
        %1079 = vrot.lane.b32.xlu0 %v904, 64
        %v1080 = vpop.permute.xlu0 %1079
        %1081 = vrot.lane.b32.xlu0 %v906, 64
        %v1082 = vpop.permute.xlu0 %1081
        %1083 = vrot.lane.b32.xlu0 %v908, 64
        %v1084 = vpop.permute.xlu0 %1083
        %1085 = vrot.lane.b32.xlu0 %v910, 64
        %v1086 = vpop.permute.xlu0 %1085
        %1087 = vrot.lane.b32.xlu0 %v912, 64
        %v1088 = vpop.permute.xlu0 %1087
        %1089 = vrot.lane.b32.xlu0 %v914, 64
        %v1090 = vpop.permute.xlu0 %1089
        %1091 = vrot.lane.b32.xlu0 %v916, 64
        %v1092 = vpop.permute.xlu0 %1091
        %1093 = vrot.lane.b32.xlu0 %v918, 64
        %v1094 = vpop.permute.xlu0 %1093
        %v1097 = vrot.slane %v916, 1
        %v1098 = vrot.slane %v929, 1
        %v1099 = vsel %vm947, %v1097, %v1098
        %v1100 = vrot.slane %v918, 1
        %v1101 = vrot.slane %v930, 1
        %v1102 = vsel %vm947, %v1100, %v1101
        %1103 = vrot.lane.b32.xlu0 %v962, 96
        %v1104 = vpop.permute.xlu0 %1103
        %1105 = vrot.lane.b32.xlu0 %v965, 96
        %v1106 = vpop.permute.xlu0 %1105
        %1107 = vrot.lane.b32.xlu0 %v968, 96
        %v1108 = vpop.permute.xlu0 %1107
        %1109 = vrot.lane.b32.xlu0 %v971, 96
        %v1110 = vpop.permute.xlu0 %1109
        %1111 = vrot.lane.b32.xlu0 %v1051, 96
        %v1112 = vpop.permute.xlu0 %1111
        %1113 = vrot.lane.b32.xlu0 %v1054, 96
        %v1114 = vpop.permute.xlu0 %1113
        %1115 = vrot.lane.b32.xlu0 %v1099, 96
        %v1116 = vpop.permute.xlu0 %1115
        %1117 = vrot.lane.b32.xlu0 %v1102, 96
        %v1118 = vpop.permute.xlu0 %1117
        %v1119 = vrot.slane %v916, 2
        %v1120 = vrot.slane %v929, 2
        %v1121 = vsel %vm988, %v1119, %v1120
        %v1122 = vrot.slane %v918, 2
        %v1123 = vrot.slane %v930, 2
        %v1124 = vsel %vm988, %v1122, %v1123
        %vm1125 = vcmask 261120
        %v1127 = vsel %vm1125, %v896, %v973
        %v1129 = vsel %vm1125, %v898, %v975
        %v1131 = vsel %vm1125, %v900, %v977
        %v1133 = vsel %vm1125, %v902, %v979
        %v1135 = vsel %vm1125, %v904, %v981
        %v1137 = vsel %vm1125, %v906, %v983
        %v1139 = vsel %vm1125, %v908, %v985
        %v1141 = vsel %vm1125, %v910, %v987
        %vm1142 = vcmask 523264
        %v1144 = vsel %vm1142, %v1127, %v1014
        %v1146 = vsel %vm1142, %v1129, %v1016
        %v1148 = vsel %vm1142, %v1131, %v1018
        %v1150 = vsel %vm1142, %v1133, %v1020
        %v1152 = vsel %vm1142, %v1135, %v1022
        %v1154 = vsel %vm1142, %v1137, %v1024
        %v1156 = vsel %vm1142, %v1139, %v1026
        %v1158 = vsel %vm1142, %v1141, %v1028
        %vm1159 = vcmask 785408
        %v1161 = vsel %vm1159, %v1144, %v1032
        %v1164 = vsel %vm1159, %v1146, %v1034
        %v1167 = vsel %vm1159, %v1148, %v1036
        %v1170 = vsel %vm1159, %v1150, %v1038
        %v1173 = vsel %vm1159, %v1152, %v1040
        %v1176 = vsel %vm1159, %v1154, %v1042
        %v1179 = vsel %vm1159, %v1156, %v1044
        %v1182 = vsel %vm1159, %v1158, %v1046
        %v1186 = vsel %vm1125, %v956, %v1062
        %v1189 = vsel %vm1125, %v959, %v1064
        %v1192 = vsel %vm1125, %v962, %v1066
        %v1195 = vsel %vm1125, %v965, %v1068
        %v1198 = vsel %vm1125, %v968, %v1070
        %v1201 = vsel %vm1125, %v971, %v1072
        %v1204 = vsel %vm1125, %v1051, %v1074
        %v1207 = vsel %vm1125, %v1054, %v1076
        %v1209 = vsel %vm1142, %v1186, %v1080
        %v1211 = vsel %vm1142, %v1189, %v1082
        %v1213 = vsel %vm1142, %v1192, %v1084
        %v1215 = vsel %vm1142, %v1195, %v1086
        %v1217 = vsel %vm1142, %v1198, %v1088
        %v1219 = vsel %vm1142, %v1201, %v1090
        %v1221 = vsel %vm1142, %v1204, %v1092
        %v1223 = vsel %vm1142, %v1207, %v1094
        %v1225 = vsel %vm1159, %v1209, %v1104
        %v1228 = vsel %vm1159, %v1211, %v1106
        %v1231 = vsel %vm1159, %v1213, %v1108
        %v1234 = vsel %vm1159, %v1215, %v1110
        %v1237 = vsel %vm1159, %v1217, %v1112
        %v1240 = vsel %vm1159, %v1219, %v1114
        %v1243 = vsel %vm1159, %v1221, %v1116
        %v1246 = vsel %vm1159, %v1223, %v1118
        %v1248 = vld [vmem:[%s4] sm:$0xf]
        %v1249 = vld [vmem:[%s4 + $0x4] sm:$0xf]
        %v1250 = vld [vmem:[%s4 + $0x8] sm:$0xf]
        %v1251 = vld [vmem:[%s4 + $0xc] sm:$0xf]
        %v1252 = vld [vmem:[%s4 + $0x10] sm:$0xf]
        %v1253 = vld [vmem:[%s4 + $0x14] sm:$0xf]
        %v1254 = vld [vmem:[%s4 + $0x18] sm:$0xf]
        %v1255 = vld [vmem:[%s4 + $0x1c] sm:$0xf]
        %v1256 = vld [vmem:[%s4 + $0x20] sm:$0xf]
        %v1257 = vld [vmem:[%s4 + $0x24] sm:$0xf]
        %v1258 = vld [vmem:[%s4 + $0x28] sm:$0xf]
        %v1259 = vld [vmem:[%s4 + $0x2c] sm:$0xf]
        %v1260 = vld [vmem:[%s4 + $0x30] sm:$0xf]
        %v1261 = vld [vmem:[%s4 + $0x34] sm:$0xf]
        %v1262 = vld [vmem:[%s4 + $0x38] sm:$0xf]
        %v1263 = vld [vmem:[%s4 + $0x3c] sm:$0xf]
        %v1264 = vld [vmem:[%s4 + $0x40] sm:$0xf]
        %v1265 = vld [vmem:[%s4 + $0x44] sm:$0xf]
        %v1266 = vld [vmem:[%s4 + $0x48] sm:$0xf]
        %v1267 = vld [vmem:[%s4 + $0x4c] sm:$0xf]
        %v1268 = vld [vmem:[%s4 + $0x50] sm:$0xf]
        %v1269 = vld [vmem:[%s4 + $0x54] sm:$0xf]
        %v1270 = vld [vmem:[%s4 + $0x58] sm:$0xf]
        %v1271 = vld [vmem:[%s4 + $0x5c] sm:$0xf]
        %v1272 = vld [vmem:[%s4 + $0x60] sm:$0xf]
        %v1273 = vld [vmem:[%s4 + $0x64] sm:$0xf]
        %v1274 = vld [vmem:[%s4 + $0x68] sm:$0xf]
        %v1275 = vld [vmem:[%s4 + $0x6c] sm:$0xf]
        %v1276 = vld [vmem:[%s4 + $0x70] sm:$0xf]
        %v1277 = vld [vmem:[%s4 + $0x74] sm:$0xf]
        %v1278 = vld [vmem:[%s4 + $0x78] sm:$0xf]
        %v1279 = vld [vmem:[%s4 + $0x7c] sm:$0xf]
        %v1280 = vld [vmem:[%s4 + $0x80] sm:$0xf]
        %v1281 = vld [vmem:[%s4 + $0x84] sm:$0xf]
        %v1282 = vld [vmem:[%s4 + $0x88] sm:$0xf]
        %v1283 = vld [vmem:[%s4 + $0x8c] sm:$0xf]
        %v1320 = vunpack.c.l.b16 %v1248
        %v1321 = vunpack.c.l.b16 %v1249
        %v1322 = vunpack.c.l.b16 %v1250
        %v1323 = vunpack.c.l.b16 %v1251
        %v1324 = vunpack.c.l.b16 %v1252
        %v1325 = vunpack.c.l.b16 %v1253
        %v1326 = vunpack.c.l.b16 %v1254
        %v1327 = vunpack.c.l.b16 %v1255
        %v1328 = vunpack.c.l.b16 %v1256
        %v1329 = vunpack.c.l.b16 %v1257
        %v1330 = vunpack.c.l.b16 %v1258
        %v1331 = vunpack.c.l.b16 %v1259
        %v1332 = vunpack.c.l.b16 %v1260
        %v1333 = vunpack.c.l.b16 %v1261
        %v1334 = vunpack.c.l.b16 %v1262
        %v1335 = vunpack.c.l.b16 %v1263
        %v1336 = vunpack.c.l.b16 %v1264
        %v1337 = vunpack.c.l.b16 %v1265
        %v1338 = vunpack.c.l.b16 %v1266
        %v1339 = vunpack.c.l.b16 %v1267
        %v1340 = vunpack.c.l.b16 %v1268
        %v1341 = vunpack.c.l.b16 %v1269
        %v1342 = vunpack.c.l.b16 %v1270
        %v1343 = vunpack.c.l.b16 %v1271
        %v1344 = vunpack.c.l.b16 %v1272
        %v1345 = vunpack.c.l.b16 %v1273
        %v1346 = vunpack.c.l.b16 %v1274
        %v1347 = vunpack.c.l.b16 %v1275
        %v1348 = vunpack.c.l.b16 %v1276
        %v1349 = vunpack.c.l.b16 %v1277
        %v1350 = vunpack.c.l.b16 %v1278
        %v1351 = vunpack.c.l.b16 %v1279
        %v1352 = vunpack.c.l.b16 %v1280
        %v1353 = vunpack.c.l.b16 %v1281
        %v1354 = vunpack.c.l.b16 %v1282
        %v1355 = vunpack.c.l.b16 %v1283
        %v1356 = vpack.c.b16 %v1321, %v1320
        %v1357 = vpack.c.b16 %v1323, %v1322
        %v1358 = vpack.c.b16 %v1325, %v1324
        %v1359 = vpack.c.b16 %v1327, %v1326
        %v1360 = vpack.c.b16 %v1329, %v1328
        %v1361 = vpack.c.b16 %v1331, %v1330
        %v1362 = vpack.c.b16 %v1333, %v1332
        %v1363 = vpack.c.b16 %v1335, %v1334
        %v1364 = vpack.c.b16 %v1337, %v1336
        %v1365 = vpack.c.b16 %v1339, %v1338
        %v1366 = vpack.c.b16 %v1341, %v1340
        %v1367 = vpack.c.b16 %v1343, %v1342
        %v1368 = vpack.c.b16 %v1345, %v1344
        %v1369 = vpack.c.b16 %v1347, %v1346
        %v1370 = vpack.c.b16 %v1349, %v1348
        %v1371 = vpack.c.b16 %v1351, %v1350
        %v1372 = vpack.c.b16 %v1353, %v1352
        %v1373 = vpack.c.b16 %v1355, %v1354
        %v1393 = vsel %vm1125, %v1003, 0
        %v1396 = vsel %vm1125, %v1006, 0
        %v1399 = vsel %vm1125, %v1009, 0
        %v1402 = vsel %vm1125, %v1012, 0
        %v1405 = vsel %vm1125, %v1057, 0
        %v1408 = vsel %vm1125, %v1060, 0
        %v1411 = vsel %vm1125, %v1121, 0
        %v1414 = vsel %vm1125, %v1124, 0
        %1416 = vmatpush.bf16.msra.mxu0 %v1363
        %1417 = vmatpush.bf16.msra.mxu0 %v1362
        %1418 = vmatpush.bf16.msra.mxu0 %v1361
        %1419 = vmatpush.bf16.msra.mxu0 %v1360
        %1420 = vmatpush.bf16.msra.mxu0 %v1359
        %1421 = vmatpush.bf16.msra.mxu0 %v1358
        %1422 = vmatpush.bf16.msra.mxu0 %v1357
        %1423 = vmatpush.bf16.msra.mxu0 %v1356
        %1424 = vmatmul.bf16.gmra.mxu0 %v1161
        %v1425 = vpop.f32.mrf.mxu0
        %v1426 = vadd.f32 0.0, %v1425
        %v1427 = vpop.f32.mrf.mxu0
        %v1428 = vadd.f32 0.0, %v1427
        %1429 = vmatmul.bf16.gmra.mxu0 %v1164
        %v1430 = vpop.f32.mrf.mxu0
        %v1431 = vadd.f32 0.0, %v1430
        %v1432 = vpop.f32.mrf.mxu0
        %v1433 = vadd.f32 0.0, %v1432
        %1434 = vmatmul.bf16.gmra.mxu0 %v1167
        %v1435 = vpop.f32.mrf.mxu0
        %v1436 = vadd.f32 0.0, %v1435
        %v1437 = vpop.f32.mrf.mxu0
        %v1438 = vadd.f32 0.0, %v1437
        %1439 = vmatmul.bf16.gmra.mxu0 %v1170
        %v1440 = vpop.f32.mrf.mxu0
        %v1441 = vadd.f32 0.0, %v1440
        %v1442 = vpop.f32.mrf.mxu0
        %v1443 = vadd.f32 0.0, %v1442
        %1444 = vmatmul.bf16.gmra.mxu0 %v1173
        %v1445 = vpop.f32.mrf.mxu0
        %v1446 = vadd.f32 0.0, %v1445
        %v1447 = vpop.f32.mrf.mxu0
        %v1448 = vadd.f32 0.0, %v1447
        %1449 = vmatmul.bf16.gmra.mxu0 %v1176
        %v1450 = vpop.f32.mrf.mxu0
        %v1451 = vadd.f32 0.0, %v1450
        %v1452 = vpop.f32.mrf.mxu0
        %v1453 = vadd.f32 0.0, %v1452
        %1454 = vmatmul.bf16.gmra.mxu0 %v1179
        %v1455 = vpop.f32.mrf.mxu0
        %v1456 = vadd.f32 0.0, %v1455
        %v1457 = vpop.f32.mrf.mxu0
        %v1458 = vadd.f32 0.0, %v1457
        %1459 = vmatmul.bf16.gmra.mxu0 %v1182
        %v1460 = vpop.f32.mrf.mxu0
        %v1461 = vadd.f32 0.0, %v1460
        %v1462 = vpop.f32.mrf.mxu0
        %v1463 = vadd.f32 0.0, %v1462
        %1464 = vdwg.mxu0
        %1465 = vmatpush.bf16.msra.mxu0 %v1371
        %1466 = vmatpush.bf16.msra.mxu0 %v1370
        %1467 = vmatpush.bf16.msra.mxu0 %v1369
        %1468 = vmatpush.bf16.msra.mxu0 %v1368
        %1469 = vmatpush.bf16.msra.mxu0 %v1367
        %1470 = vmatpush.bf16.msra.mxu0 %v1366
        %1471 = vmatpush.bf16.msra.mxu0 %v1365
        %1472 = vmatpush.bf16.msra.mxu0 %v1364
        %1473 = vmatmul.bf16.gmra.mxu0 %v1225
        %v1474 = vpop.f32.mrf.mxu0
        %v1475 = vadd.f32 %v1426, %v1474
        %v1476 = vpop.f32.mrf.mxu0
        %v1477 = vadd.f32 %v1428, %v1476
        %1478 = vmatmul.bf16.gmra.mxu0 %v1228
        %v1479 = vpop.f32.mrf.mxu0
        %v1480 = vadd.f32 %v1431, %v1479
        %v1481 = vpop.f32.mrf.mxu0
        %v1482 = vadd.f32 %v1433, %v1481
        %1483 = vmatmul.bf16.gmra.mxu0 %v1231
        %v1484 = vpop.f32.mrf.mxu0
        %v1485 = vadd.f32 %v1436, %v1484
        %v1486 = vpop.f32.mrf.mxu0
        %v1487 = vadd.f32 %v1438, %v1486
        %1488 = vmatmul.bf16.gmra.mxu0 %v1234
        %v1489 = vpop.f32.mrf.mxu0
        %v1490 = vadd.f32 %v1441, %v1489
        %v1491 = vpop.f32.mrf.mxu0
        %v1492 = vadd.f32 %v1443, %v1491
        %1493 = vmatmul.bf16.gmra.mxu0 %v1237
        %v1494 = vpop.f32.mrf.mxu0
        %v1495 = vadd.f32 %v1446, %v1494
        %v1496 = vpop.f32.mrf.mxu0
        %v1497 = vadd.f32 %v1448, %v1496
        %1498 = vmatmul.bf16.gmra.mxu0 %v1240
        %v1499 = vpop.f32.mrf.mxu0
        %v1500 = vadd.f32 %v1451, %v1499
        %v1501 = vpop.f32.mrf.mxu0
        %v1502 = vadd.f32 %v1453, %v1501
        %1503 = vmatmul.bf16.gmra.mxu0 %v1243
        %v1504 = vpop.f32.mrf.mxu0
        %v1505 = vadd.f32 %v1456, %v1504
        %v1506 = vpop.f32.mrf.mxu0
        %v1507 = vadd.f32 %v1458, %v1506
        %1508 = vmatmul.bf16.gmra.mxu0 %v1246
        %v1509 = vpop.f32.mrf.mxu0
        %v1510 = vadd.f32 %v1461, %v1509
        %v1511 = vpop.f32.mrf.mxu0
        %v1512 = vadd.f32 %v1463, %v1511
        %1513 = vdwg.mxu0
        %1514 = vmatpush.bf16.msra.mxu0 0
        %1515 = vmatpush.bf16.msra.mxu0 0
        %1516 = vmatpush.bf16.msra.mxu0 0
        %1517 = vmatpush.bf16.msra.mxu0 0
        %1518 = vmatpush.bf16.msra.mxu0 0
        %1519 = vmatpush.bf16.msra.mxu0 0
        %1520 = vmatpush.bf16.msra.mxu0 %v1373
        %1521 = vmatpush.bf16.msra.mxu0 %v1372
        %1522 = vmatmul.bf16.gmra.mxu0 %v1393
        %v1523 = vpop.f32.mrf.mxu0
        %v1524 = vadd.f32 %v1475, %v1523
        %v1525 = vpop.f32.mrf.mxu0
        %v1526 = vadd.f32 %v1477, %v1525
        %1527 = vmatmul.bf16.gmra.mxu0 %v1396
        %v1528 = vpop.f32.mrf.mxu0
        %v1529 = vadd.f32 %v1480, %v1528
        %v1530 = vpop.f32.mrf.mxu0
        %v1531 = vadd.f32 %v1482, %v1530
        %1532 = vmatmul.bf16.gmra.mxu0 %v1399
        %v1533 = vpop.f32.mrf.mxu0
        %v1534 = vadd.f32 %v1485, %v1533
        %v1535 = vpop.f32.mrf.mxu0
        %v1536 = vadd.f32 %v1487, %v1535
        %1537 = vmatmul.bf16.gmra.mxu0 %v1402
        %v1538 = vpop.f32.mrf.mxu0
        %v1539 = vadd.f32 %v1490, %v1538
        %v1540 = vpop.f32.mrf.mxu0
        %v1541 = vadd.f32 %v1492, %v1540
        %1542 = vmatmul.bf16.gmra.mxu0 %v1405
        %v1543 = vpop.f32.mrf.mxu0
        %v1544 = vadd.f32 %v1495, %v1543
        %v1545 = vpop.f32.mrf.mxu0
        %v1546 = vadd.f32 %v1497, %v1545
        %1547 = vmatmul.bf16.gmra.mxu0 %v1408
        %v1548 = vpop.f32.mrf.mxu0
        %v1549 = vadd.f32 %v1500, %v1548
        %v1550 = vpop.f32.mrf.mxu0
        %v1551 = vadd.f32 %v1502, %v1550
        %1552 = vmatmul.bf16.gmra.mxu0 %v1411
        %v1553 = vpop.f32.mrf.mxu0
        %v1554 = vadd.f32 %v1505, %v1553
        %v1555 = vpop.f32.mrf.mxu0
        %v1556 = vadd.f32 %v1507, %v1555
        %1557 = vmatmul.bf16.gmra.mxu0 %v1414
        %v1558 = vpop.f32.mrf.mxu0
        %v1559 = vadd.f32 %v1510, %v1558
        %v1560 = vpop.f32.mrf.mxu0
        %v1561 = vadd.f32 %v1512, %v1560
        %1562 = vdwg.mxu0
        %v1563 = vld [vmem:[%s5] sm:$0x1]
        %v1565 = vperm.slane %v1563, 0
        %v1567 = vmul.f32 %v1524, %v1565
        %v1568 = vmul.f32 %v1526, %v1565
        %v1569 = vmul.f32 %v1529, %v1565
        %v1570 = vmul.f32 %v1531, %v1565
        %v1571 = vmul.f32 %v1534, %v1565
        %v1572 = vmul.f32 %v1536, %v1565
        %v1573 = vmul.f32 %v1539, %v1565
        %v1574 = vmul.f32 %v1541, %v1565
        %v1575 = vmul.f32 %v1544, %v1565
        %v1576 = vmul.f32 %v1546, %v1565
        %v1577 = vmul.f32 %v1549, %v1565
        %v1578 = vmul.f32 %v1551, %v1565
        %v1579 = vmul.f32 %v1554, %v1565
        %v1580 = vmul.f32 %v1556, %v1565
        %v1581 = vmul.f32 %v1559, %v1565
        %v1582 = vmul.f32 %v1561, %v1565
        %v1583 = vld [vmem:[%s6] sm:$0x1]
        %v1585 = vperm.slane %v1583, 0
        %v1587 = vadd.f32 %v1567, %v1585
        %v1588 = vadd.f32 %v1568, %v1585
        %v1589 = vadd.f32 %v1569, %v1585
        %v1590 = vadd.f32 %v1570, %v1585
        %v1591 = vadd.f32 %v1571, %v1585
        %v1592 = vadd.f32 %v1572, %v1585
        %v1593 = vadd.f32 %v1573, %v1585
        %v1594 = vadd.f32 %v1574, %v1585
        %v1595 = vadd.f32 %v1575, %v1585
        %v1596 = vadd.f32 %v1576, %v1585
        %v1597 = vadd.f32 %v1577, %v1585
        %v1598 = vadd.f32 %v1578, %v1585
        %v1599 = vadd.f32 %v1579, %v1585
        %v1600 = vadd.f32 %v1580, %v1585
        %v1601 = vadd.f32 %v1581, %v1585
        %v1602 = vadd.f32 %v1582, %v1585
        %v1603 = vmax.f32 %v1587, 0.0
        %v1604 = vmax.f32 %v1588, 0.0
        %v1605 = vmax.f32 %v1589, 0.0
        %v1606 = vmax.f32 %v1590, 0.0
        %v1607 = vmax.f32 %v1591, 0.0
        %v1608 = vmax.f32 %v1592, 0.0
        %v1609 = vmax.f32 %v1593, 0.0
        %v1610 = vmax.f32 %v1594, 0.0
        %v1611 = vmax.f32 %v1595, 0.0
        %v1612 = vmax.f32 %v1596, 0.0
        %v1613 = vmax.f32 %v1597, 0.0
        %v1614 = vmax.f32 %v1598, 0.0
        %v1615 = vmax.f32 %v1599, 0.0
        %v1616 = vmax.f32 %v1600, 0.0
        %v1617 = vmax.f32 %v1601, 0.0
        %v1618 = vmax.f32 %v1602, 0.0
        %v1619 = vpack.c.bf16 %v1604, %v1603
        %v1620 = vpack.c.bf16 %v1606, %v1605
        %v1621 = vpack.c.bf16 %v1608, %v1607
        %v1622 = vpack.c.bf16 %v1610, %v1609
        %v1623 = vpack.c.bf16 %v1612, %v1611
        %v1624 = vpack.c.bf16 %v1614, %v1613
        %v1625 = vpack.c.bf16 %v1616, %v1615
        %v1626 = vpack.c.bf16 %v1618, %v1617
        %v1627 = vld [vmem:[%s7] sm:$0xf]
        %v1628 = vld [vmem:[%s7 + $0x4] sm:$0xf]
        %v1629 = vld [vmem:[%s7 + $0x8] sm:$0xf]
        %v1630 = vld [vmem:[%s7 + $0xc] sm:$0xf]
        %v1635 = vunpack.c.l.b16 %v1627
        %v1636 = vunpack.c.l.b16 %v1628
        %v1637 = vunpack.c.l.b16 %v1629
        %v1638 = vunpack.c.l.b16 %v1630
        %v1639 = vpack.c.b16 %v1636, %v1635
        %v1640 = vpack.c.b16 %v1638, %v1637
        %v1644 = vsel %vm1125, %v1619, 0
        %v1647 = vsel %vm1125, %v1620, 0
        %v1650 = vsel %vm1125, %v1621, 0
        %v1653 = vsel %vm1125, %v1622, 0
        %v1656 = vsel %vm1125, %v1623, 0
        %v1659 = vsel %vm1125, %v1624, 0
        %v1662 = vsel %vm1125, %v1625, 0
        %v1665 = vsel %vm1125, %v1626, 0
        %1667 = vmatpush.bf16.msra.mxu0 0
        %1668 = vmatpush.bf16.msra.mxu0 0
        %1669 = vmatpush.bf16.msra.mxu0 0
        %1670 = vmatpush.bf16.msra.mxu0 0
        %1671 = vmatpush.bf16.msra.mxu0 0
        %1672 = vmatpush.bf16.msra.mxu0 0
        %1673 = vmatpush.bf16.msra.mxu0 %v1640
        %1674 = vmatpush.bf16.msra.mxu0 %v1639
        %1675 = vmatmul.bf16.gmra.mxu0 %v1644
        %v1676 = vpop.f32.mrf.mxu0
        %v1677 = vadd.f32 0.0, %v1676
        %v1678 = vpop.f32.mrf.mxu0
        %v1679 = vadd.f32 0.0, %v1678
        %1680 = vmatmul.bf16.gmra.mxu0 %v1647
        %v1681 = vpop.f32.mrf.mxu0
        %v1682 = vadd.f32 0.0, %v1681
        %v1683 = vpop.f32.mrf.mxu0
        %v1684 = vadd.f32 0.0, %v1683
        %1685 = vmatmul.bf16.gmra.mxu0 %v1650
        %v1686 = vpop.f32.mrf.mxu0
        %v1687 = vadd.f32 0.0, %v1686
        %v1688 = vpop.f32.mrf.mxu0
        %v1689 = vadd.f32 0.0, %v1688
        %1690 = vmatmul.bf16.gmra.mxu0 %v1653
        %v1691 = vpop.f32.mrf.mxu0
        %v1692 = vadd.f32 0.0, %v1691
        %v1693 = vpop.f32.mrf.mxu0
        %v1694 = vadd.f32 0.0, %v1693
        %1695 = vmatmul.bf16.gmra.mxu0 %v1656
        %v1696 = vpop.f32.mrf.mxu0
        %v1697 = vadd.f32 0.0, %v1696
        %v1698 = vpop.f32.mrf.mxu0
        %v1699 = vadd.f32 0.0, %v1698
        %1700 = vmatmul.bf16.gmra.mxu0 %v1659
        %v1701 = vpop.f32.mrf.mxu0
        %v1702 = vadd.f32 0.0, %v1701
        %v1703 = vpop.f32.mrf.mxu0
        %v1704 = vadd.f32 0.0, %v1703
        %1705 = vmatmul.bf16.gmra.mxu0 %v1662
        %v1706 = vpop.f32.mrf.mxu0
        %v1707 = vadd.f32 0.0, %v1706
        %v1708 = vpop.f32.mrf.mxu0
        %v1709 = vadd.f32 0.0, %v1708
        %1710 = vmatmul.bf16.gmra.mxu0 %v1665
        %v1711 = vpop.f32.mrf.mxu0
        %v1712 = vadd.f32 0.0, %v1711
        %v1713 = vpop.f32.mrf.mxu0
        %v1714 = vadd.f32 0.0, %v1713
        %1715 = vdwg.mxu0
        %v1716 = vld [vmem:[%s8] sm:$0x1]
        %v1718 = vperm.slane %v1716, 0
        %v1720 = vmul.f32 %v1677, %v1718
        %v1721 = vmul.f32 %v1679, %v1718
        %v1722 = vmul.f32 %v1682, %v1718
        %v1723 = vmul.f32 %v1684, %v1718
        %v1724 = vmul.f32 %v1687, %v1718
        %v1725 = vmul.f32 %v1689, %v1718
        %v1726 = vmul.f32 %v1692, %v1718
        %v1727 = vmul.f32 %v1694, %v1718
        %v1728 = vmul.f32 %v1697, %v1718
        %v1729 = vmul.f32 %v1699, %v1718
        %v1730 = vmul.f32 %v1702, %v1718
        %v1731 = vmul.f32 %v1704, %v1718
        %v1732 = vmul.f32 %v1707, %v1718
        %v1733 = vmul.f32 %v1709, %v1718
        %v1734 = vmul.f32 %v1712, %v1718
        %v1735 = vmul.f32 %v1714, %v1718
        %v1736 = vld [vmem:[%s9] sm:$0x1]
        %v1738 = vperm.slane %v1736, 0
        %v1740 = vadd.f32 %v1720, %v1738
        %v1741 = vadd.f32 %v1721, %v1738
        %v1742 = vadd.f32 %v1722, %v1738
        %v1743 = vadd.f32 %v1723, %v1738
        %v1744 = vadd.f32 %v1724, %v1738
        %v1745 = vadd.f32 %v1725, %v1738
        %v1746 = vadd.f32 %v1726, %v1738
        %v1747 = vadd.f32 %v1727, %v1738
        %v1748 = vadd.f32 %v1728, %v1738
        %v1749 = vadd.f32 %v1729, %v1738
        %v1750 = vadd.f32 %v1730, %v1738
        %v1751 = vadd.f32 %v1731, %v1738
        %v1752 = vadd.f32 %v1732, %v1738
        %v1753 = vadd.f32 %v1733, %v1738
        %v1754 = vadd.f32 %v1734, %v1738
        %v1755 = vadd.f32 %v1735, %v1738
        %v1756 = vunpack.c.l.bf16 %v395
        %v1757 = vunpack.c.l.bf16 %v396
        %v1758 = vunpack.c.l.bf16 %v397
        %v1759 = vunpack.c.l.bf16 %v398
        %v1760 = vunpack.c.l.bf16 %v399
        %v1761 = vunpack.c.l.bf16 %v400
        %v1762 = vunpack.c.l.bf16 %v401
        %v1763 = vunpack.c.l.bf16 %v402
        %v1764 = vunpack.c.l.bf16 %v403
        %v1765 = vunpack.c.l.bf16 %v404
        %v1766 = vunpack.c.l.bf16 %v405
        %v1767 = vunpack.c.l.bf16 %v406
        %v1768 = vunpack.c.l.bf16 %v407
        %v1769 = vunpack.c.l.bf16 %v408
        %v1770 = vunpack.c.l.bf16 %v409
        %v1771 = vunpack.c.l.bf16 %v410
        %v1772 = vadd.f32 %v1740, %v1756
        %v1773 = vadd.f32 %v1741, %v1757
        %v1774 = vadd.f32 %v1742, %v1758
        %v1775 = vadd.f32 %v1743, %v1759
        %v1776 = vadd.f32 %v1744, %v1760
        %v1777 = vadd.f32 %v1745, %v1761
        %v1778 = vadd.f32 %v1746, %v1762
        %v1779 = vadd.f32 %v1747, %v1763
        %v1780 = vadd.f32 %v1748, %v1764
        %v1781 = vadd.f32 %v1749, %v1765
        %v1782 = vadd.f32 %v1750, %v1766
        %v1783 = vadd.f32 %v1751, %v1767
        %v1784 = vadd.f32 %v1752, %v1768
        %v1785 = vadd.f32 %v1753, %v1769
        %v1786 = vadd.f32 %v1754, %v1770
        %v1787 = vadd.f32 %v1755, %v1771
        %v1788 = vmax.f32 %v1772, 0.0
        %v1789 = vmax.f32 %v1773, 0.0
        %v1790 = vmax.f32 %v1774, 0.0
        %v1791 = vmax.f32 %v1775, 0.0
        %v1792 = vmax.f32 %v1776, 0.0
        %v1793 = vmax.f32 %v1777, 0.0
        %v1794 = vmax.f32 %v1778, 0.0
        %v1795 = vmax.f32 %v1779, 0.0
        %v1796 = vmax.f32 %v1780, 0.0
        %v1797 = vmax.f32 %v1781, 0.0
        %v1798 = vmax.f32 %v1782, 0.0
        %v1799 = vmax.f32 %v1783, 0.0
        %v1800 = vmax.f32 %v1784, 0.0
        %v1801 = vmax.f32 %v1785, 0.0
        %v1802 = vmax.f32 %v1786, 0.0
        %v1803 = vmax.f32 %v1787, 0.0
        %1804 = vst [vmem:[%s325] sm:$0xff] %v1788
        %1805 = vst [vmem:[%s325 + $0x8] sm:$0xff] %v1789
        %1806 = vst [vmem:[%s325 + $0x10] sm:$0xff] %v1790
        %1807 = vst [vmem:[%s325 + $0x18] sm:$0xff] %v1791
        %1808 = vst [vmem:[%s325 + $0x20] sm:$0xff] %v1792
        %1809 = vst [vmem:[%s325 + $0x28] sm:$0xff] %v1793
        %1810 = vst [vmem:[%s325 + $0x30] sm:$0xff] %v1794
        %1811 = vst [vmem:[%s325 + $0x38] sm:$0xff] %v1795
        %1812 = vst [vmem:[%s325 + $0x40] sm:$0xff] %v1796
        %1813 = vst [vmem:[%s325 + $0x48] sm:$0xff] %v1797
        %1814 = vst [vmem:[%s325 + $0x50] sm:$0xff] %v1798
        %1815 = vst [vmem:[%s325 + $0x58] sm:$0xff] %v1799
        %1816 = vst [vmem:[%s325 + $0x60] sm:$0xff] %v1800
        %1817 = vst [vmem:[%s325 + $0x68] sm:$0xff] %v1801
        %1818 = vst [vmem:[%s325 + $0x70] sm:$0xff] %v1802
        %1819 = vst [vmem:[%s325 + $0x78] sm:$0xff] %v1803
        %s1820 = sand.u32 %s235, 1
        %s1821 = scalar_lea.sflag [#allocation5], %s1820
        %s1822 = sand.u32 %s235, 1
        %s1823 = smul.addr %s1822, 128
        %s1824 = scalar_lea.vmem [#allocation4], %s1823
        // Predicated region
        $region73: #{tpu_custom_call.1} parent=55 // pred_check
          %p1825 = pneg %p245
        $region74: #{tpu_custom_call.1} parent=55 // pred_check_branch
          %1827 = sbr.rel (%p1825) target = $region76
        $region75: #{tpu_custom_call.1} parent=55 // pred_region
          %s1828 = smul.u32 8, %s29
          %1830 = vsyncadd %s1821, 0
          %s1831 = smul.addr %s1828, 2
          %s1832 = smul.addr %s28, 32
          %s1833 = sadd.s32 %s1831, %s1832
          %s1834 = smul.addr %s1833, 8
          %s1835 = scalar_lea.hbm %s10, %s1834
          %s1836 = sshll.u32 %s1824, 4
          %s1837 = int_to_ptr.vmem [resolvable:$true] %s1836
          %s1838 = sshll.u32 %s1835, 4
          %s1839 = int_to_ptr.hbm [resolvable:$true] %s1838
          %1844 = dma.vmem_to_hbm [thread:$0]  %s1837, 2048, %s1839, %s1821, 128, 128, 8
        $region76: #{tpu_custom_call.1} parent=55 // pred_fallthru
          _
      $region56: #{tpu_custom_call.1} parent=5 // pred_fallthru
        _
      %p1845 = scmp.le.s32.totalorder 2, %s19
      // Predicated region
      $region77: #{tpu_custom_call.1} parent=5 // pred_check
        %p1846 = pneg %p1845
      $region78: #{tpu_custom_call.1} parent=5 // pred_check_branch
        %1848 = sbr.rel (%p1846) target = $region80
      $region79: #{tpu_custom_call.1} parent=5 // pred_region
        %s1849 = ssub.s32 %s19, 2
        // Predicated region
        $region81: #{tpu_custom_call.1} parent=79 // pred_check
          %p1850 = pneg %p251
        $region82: #{tpu_custom_call.1} parent=79 // pred_check_branch
          %1852 = sbr.rel (%p1850) target = $region84
        $region83: #{tpu_custom_call.1} parent=79 // pred_region
          %s1853 = sand.u32 %s236, 1
          %s1854 = scalar_lea.sflag [#allocation5], %s1853
          %s1855 = sand.u32 %s236, 1
          %s1856 = smul.addr %s1855, 128
          %s1857 = scalar_lea.vmem [#allocation4], %s1856
          %1859 = dma.done %s1854, 2048
        $region84: #{tpu_custom_call.1} parent=79 // pred_fallthru
          _
      $region80: #{tpu_custom_call.1} parent=5 // pred_fallthru
        _
    $region6: #{tpu_custom_call.1} parent=1 // loop_footer
      %s23 = sadd.s32 1, %s19
    $region7: #{tpu_custom_call.1} parent=1 // loop_footer_branch
      %18 = sbr.rel target = $region3
    $region8: #{tpu_custom_call.1} parent=1 // loop_exit
      _
    %1860 = vsyncpa [#allocation5], 1
    %s1861 = scalar_lea.sflag [#allocation5], 1
    %1862 = vsyncpa %s1861, 1
  %1863 = vsyncmov [#allocation3]
  %s1864 = vpop.sfrf %1863
  %p1865 = scmp.eq.s32.totalorder %s1864, 0
  %p1866 = pneg %p1865
  %1868 = shalt.err (%p1866)
  %s1869 = scalar_lea.sflag [#allocation3], 1
  %1870 = vsyncmov %s1869
  %s1871 = vpop.sfrf %1870
  %p1872 = scmp.eq.s32.totalorder %s1871, 0
  %p1873 = pneg %p1872
  %1875 = shalt.err (%p1873)

</llo_original>
